<compile_context>
chip_gen: v5e
topology: v5e:2x2
jax: 0.10.0
libtpu: 0.0.40
codegen_flags: <defaults>
</compile_context>

<pallas_src>
import jax
import jax.numpy as jnp
import numpy as np
from jax.experimental import pallas as pl
from jax.experimental.pallas import tpu as pltpu


NUM_FREQS = 16  # fourier timestep features -> cond_dim = 2 * NUM_FREQS


# ---------------------------------------------------------------------------
# Pallas kernel: one (batch, T-tile) block per grid step.  Feature-major
# layout: activations are (channels/hidden, tT) with tT on the 128-lane axis.
# ---------------------------------------------------------------------------
def unet1d_kernel(
    x_ref,       # (1, Cin, tT)  bf16 NCL latent tile
    gain_ref,    # (1, H, 1)     f32  per-batch FiLM gain  (1 + scale)
    shift_ref,   # (1, H, 1)     f32  per-batch FiLM shift (+ folded b_in)
    w_in,        # (H, Cin)      bf16
    w_mid,       # (H, H)        bf16
    w_out,       # (Cout, H)     bf16
    b_mid,       # (H, 1)        f32
    b_out,       # (Cout, 1)     f32
    out_ref,     # (1, Cout, tT) f32
):
    f32 = jnp.float32
    bf16 = jnp.bfloat16

    x_ct = x_ref[0]          # (Cin, tT) bf16
    g = gain_ref[0]          # (H, 1)
    s = shift_ref[0]         # (H, 1)

    # input 1x1 conv: (H, Cin) @ (Cin, tT) keeps T on the lane axis
    h = jnp.dot(w_in[...], x_ct, preferred_element_type=f32)         # (H, tT)

    # FiLM (timestep conditioning precomputed outside the kernel)
    h = h * g + s

    # pointwise residual block
    a = jax.nn.gelu(h, approximate=True).astype(bf16)
    h = h + jnp.dot(w_mid[...], a, preferred_element_type=f32) + b_mid[...]
    h = jax.nn.gelu(h, approximate=True).astype(bf16)

    # output 1x1 conv, produced directly in NCL: lane-dense store
    out_ct = jnp.dot(w_out[...], h, preferred_element_type=f32) + b_out[...]
    out_ref[0] = out_ct.astype(out_ref.dtype)


KERNEL_WEIGHTS = ("w_in", "w_mid", "w_out", "b_mid", "b_out")


def _weight_spec(w):
    nd = w.ndim
    # Constant index_map -> the weight block is DMA'd once and re-used.
    return pl.BlockSpec(w.shape, lambda b, j, _nd=nd: (0,) * _nd)


def _round_up(x, m):
    return ((x + m - 1) // m) * m


def _tpu_budget():
    """(max T tile, vmem_limit_bytes) per TPU generation."""
    kind = ""
    try:
        kind = jax.devices()[0].device_kind.lower()
    except Exception:
        pass
    if "v7" in kind:
        # v7x: 64 MiB VMEM per TensorCore -> smaller tile, leave headroom.
        return 4096, 48 * 1024 * 1024
    # v5e / v6e: 128 MiB physical VMEM; raise the (16/32 MiB) scoped default.
    return 8192, 64 * 1024 * 1024


def _plan_t_tiling(T, B, max_tile):
    """Pick a 128-aligned T tile that divides a (zero-padded) T exactly."""
    T0 = _round_up(T, 128)
    n_tiles = max((T0 + max_tile - 1) // max_tile, 1)
    # keep >= 2 parallel grid iterations so both v7x TensorCores get work
    if B < 2 and n_tiles < 2 and T0 > 128:
        n_tiles = 2
    tile = _round_up((T0 + n_tiles - 1) // n_tiles, 128)
    return tile, n_tiles, tile * n_tiles


def _call_kernel(params, x, gain, shift, io_channels, hidden,
                 tile_t, n_tiles, vmem_limit):
    B, Cin, T_pad = x.shape
    weights = [params[k] for k in KERNEL_WEIGHTS]
    grid = (B, n_tiles)

    in_specs = [
        pl.BlockSpec((1, Cin, tile_t), lambda b, j: (b, 0, j)),
        pl.BlockSpec((1, hidden, 1), lambda b, j: (b, 0, 0)),
        pl.BlockSpec((1, hidden, 1), lambda b, j: (b, 0, 0)),
    ] + [_weight_spec(w) for w in weights]

    return pl.pallas_call(
        unet1d_kernel,
        out_shape=jax.ShapeDtypeStruct((B, io_channels, T_pad), jnp.float32),
        grid=grid,
        in_specs=in_specs,
        out_specs=pl.BlockSpec((1, io_channels, tile_t), lambda b, j: (b, 0, j)),
        compiler_params=pltpu.CompilerParams(
            dimension_semantics=("parallel", "parallel"),
            vmem_limit_bytes=vmem_limit),
    )(x, gain, shift, *weights)


# ---------------------------------------------------------------------------
# Plain-JAX glue: fourier features, FiLM precompute, parameter init, wrapper.
# ---------------------------------------------------------------------------
def fourier_features(t):
    freqs = jnp.exp(jnp.linspace(jnp.log(1.0), jnp.log(1000.0), NUM_FREQS))
    ang = 2.0 * jnp.pi * t.astype(jnp.float32)[:, None] * freqs[None, :]
    return jnp.concatenate([jnp.cos(ang), jnp.sin(ang)], axis=-1)  # (B, 2*NF)


def film_precompute(params, t, hidden):
    """Timestep MLP + FiLM projection, hoisted out of the Pallas kernel.

    Returns per-batch (gain, shift) of shape (B, H, 1); the input-conv bias is
    folded into shift so the kernel only does h*gain + shift.
    """
    bf16, f32 = jnp.bfloat16, jnp.float32
    H = hidden
    cond = fourier_features(t)[..., None].astype(bf16)            # (B, Dc, 1)

    def per_batch(c):
        ht = jax.nn.gelu(
            jnp.dot(params["w_t1"], c, preferred_element_type=f32)
            + params["b_t1"], approximate=True)
        emb = jnp.dot(params["w_t2"], ht.astype(bf16),
                      preferred_element_type=f32) + params["b_t2"]
        film = jnp.dot(params["w_film"], emb.astype(bf16),
                       preferred_element_type=f32) + params["b_film"]
        scale, shift = film[:H], film[H:]
        gain = 1.0 + scale
        return gain, shift + gain * params["b_in"]

    return jax.vmap(per_batch)(cond)                              # 2x (B, H, 1)


def init_unet1d_params(key, *, in_ch, out_ch, hidden, cond_dim):
    ks = iter(jax.random.split(key, 6))

    def lin(rows, cols, fan_in):
        w = jax.random.normal(next(ks), (rows, cols), jnp.float32) * (fan_in ** -0.5)
        # 0.5 factor mimics the wrapper's `param *= 0.5` at init time.
        return (0.5 * w).astype(jnp.bfloat16)

    return dict(
        w_t1=lin(hidden, cond_dim, cond_dim),
        w_t2=lin(hidden, hidden, hidden),
        w_film=lin(2 * hidden, hidden, hidden),
        w_in=lin(hidden, in_ch, in_ch),
        w_mid=lin(hidden, hidden, hidden),
        w_out=lin(out_ch, hidden, hidden),
        b_t1=jnp.zeros((hidden, 1), jnp.float32),
        b_t2=jnp.zeros((hidden, 1), jnp.float32),
        b_in=jnp.zeros((hidden, 1), jnp.float32),
        b_mid=jnp.zeros((hidden, 1), jnp.float32),
        b_film=jnp.zeros((2 * hidden, 1), jnp.float32),
        b_out=jnp.zeros((out_ch, 1), jnp.float32),
    )


class UNet1DUncondWrapper:
    """JAX/Pallas port of the torch UNet1DUncondWrapper (DiffusionModel)."""

    def __init__(self, in_channels, *args, hidden=128, key=None, **kwargs):
        # TODO(synk): the real adp.UNet1d (multi-scale down/upsample conv
        # stacks + self-attention) is not in the spec; a compact pointwise
        # FiLM network stands in for it.  The 0.5 parameter scaling of the
        # torch wrapper is applied at init.  (On v7x, hidden=256 would fill
        # the 256x256 MXU tile; 128 is kept as the portable default.)
        del args, kwargs
        self.io_channels = in_channels
        self.hidden = hidden
        key = jax.random.PRNGKey(0) if key is None else key
        self.params = init_unet1d_params(
            key, in_ch=in_channels, out_ch=in_channels,
            hidden=hidden, cond_dim=2 * NUM_FREQS)

    def forward(self, x, t, **kwargs):
        del kwargs  # TODO(synk): extra UNet1d forward kwargs (features, ...) unused
        B, C, T = x.shape
        gain, shift = film_precompute(self.params, t, self.hidden)  # (B, H, 1)

        max_tile, vmem_limit = _tpu_budget()
        tile_t, n_tiles, T_pad = _plan_t_tiling(T, B, max_tile)

        x_bf = x.astype(jnp.bfloat16)            # halve per-tile HBM traffic
        if T_pad != T:
            x_bf = jnp.pad(x_bf, ((0, 0), (0, 0), (0, T_pad - T)))

        out = _call_kernel(self.params, x_bf, gain, shift,
                           self.io_channels, self.hidden,
                           tile_t, n_tiles, vmem_limit)
        if T_pad != T:
            out = out[:, :, :T]
        return out

    def __call__(self, x, t, **kwargs):
        return self.forward(x, t, **kwargs)


# ---------------------------------------------------------------------------
# Pure-JAX reference (identical math, incl. bf16 matmul operands).
# ---------------------------------------------------------------------------
def _reference(params, x, t, hidden):
    bf16, f32 = jnp.bfloat16, jnp.float32
    gain, shift = film_precompute(params, t, hidden)

    def per_batch(x_ct, g, s):
        h = jnp.dot(params["w_in"], x_ct.astype(bf16),
                    preferred_element_type=f32)
        h = h * g + s
        a = jax.nn.gelu(h, approximate=True).astype(bf16)
        h = h + jnp.dot(params["w_mid"], a,
                        preferred_element_type=f32) + params["b_mid"]
        h = jax.nn.gelu(h, approximate=True).astype(bf16)
        return jnp.dot(params["w_out"], h,
                       preferred_element_type=f32) + params["b_out"]

    return jax.vmap(per_batch)(x.astype(f32), gain, shift)


if __name__ == "__main__":
    B, C, T = 2, 4, 256          # x: (B, in_channels, T), NCL like torch
    HIDDEN = 128                 # fills the 128-lane axis / v5e MXU tile

    key = jax.random.PRNGKey(0)
    kx, kt = jax.random.split(key, 2)
    x = jax.random.normal(kx, (B, C, T), jnp.float32)
    t = jax.random.uniform(kt, (B,), jnp.float32)

    wrapper = UNet1DUncondWrapper(in_channels=C, hidden=HIDDEN,
                                  key=jax.random.PRNGKey(0))

    out = wrapper(x, t)
    out = jax.block_until_ready(out)
    assert out.shape == (B, C, T)

    # silent correctness check against a pure-JAX reference
    ref = _reference(wrapper.params, x, t, HIDDEN)
    np.testing.assert_allclose(np.asarray(out), np.asarray(ref),
                               rtol=1e-2, atol=1e-2)

    print("KERNEL_OK")
</pallas_src>

<mosaic_0001>
module attributes {stable_mosaic.version = 11 : i64} {
  func.func @unet1d_kernel(%arg0: i32, %arg1: i32, %arg2: memref<1x4x256xbf16, #tpu.memory_space<vmem>>, %arg3: memref<1x128x1xf32, #tpu.memory_space<vmem>>, %arg4: memref<1x128x1xf32, #tpu.memory_space<vmem>>, %arg5: memref<128x4xbf16, #tpu.memory_space<vmem>>, %arg6: memref<128x128xbf16, #tpu.memory_space<vmem>>, %arg7: memref<4x128xbf16, #tpu.memory_space<vmem>>, %arg8: memref<128x1xf32, #tpu.memory_space<vmem>>, %arg9: memref<4x1xf32, #tpu.memory_space<vmem>>, %arg10: memref<1x4x256xf32, #tpu.memory_space<vmem>>) attributes {dimension_semantics = [#tpu.dimension_semantics<parallel>, #tpu.dimension_semantics<parallel>], iteration_bounds = array<i64: 2, 1>, scalar_prefetch = 0 : i64, scratch_operands = 0 : i64, tpu.core_type = #tpu.core_type<tc>, window_params = [{transform_indices = @transform_0, window_bounds = array<i64: 1, 4, 256>}, {transform_indices = @transform_1, window_bounds = array<i64: 1, 128, 1>}, {transform_indices = @transform_2, window_bounds = array<i64: 1, 128, 1>}, {pipeline_mode = #tpu.pipeline_mode<synchronous>, transform_indices = @transform_3, window_bounds = array<i64: 128, 4>}, {pipeline_mode = #tpu.pipeline_mode<synchronous>, transform_indices = @transform_4, window_bounds = array<i64: 128, 128>}, {pipeline_mode = #tpu.pipeline_mode<synchronous>, transform_indices = @transform_5, window_bounds = array<i64: 4, 128>}, {pipeline_mode = #tpu.pipeline_mode<synchronous>, transform_indices = @transform_6, window_bounds = array<i64: 128, 1>}, {pipeline_mode = #tpu.pipeline_mode<synchronous>, transform_indices = @transform_7, window_bounds = array<i64: 4, 1>}, {transform_indices = @transform_8, window_bounds = array<i64: 1, 4, 256>}]} {
    %c0 = arith.constant 0 : index
    %c0_0 = arith.constant 0 : index
    %c0_1 = arith.constant 0 : index
    %0 = vector.load %arg2[%c0, %c0_0, %c0_1] : memref<1x4x256xbf16, #tpu.memory_space<vmem>>, vector<1x4x256xbf16>
    %1 = vector.shape_cast %0 : vector<1x4x256xbf16> to vector<4x256xbf16>
    %c0_2 = arith.constant 0 : index
    %c0_3 = arith.constant 0 : index
    %c0_4 = arith.constant 0 : index
    %2 = vector.load %arg3[%c0_2, %c0_3, %c0_4] : memref<1x128x1xf32, #tpu.memory_space<vmem>>, vector<1x128x1xf32>
    %3 = vector.shape_cast %2 : vector<1x128x1xf32> to vector<128x1xf32>
    %c0_5 = arith.constant 0 : index
    %c0_6 = arith.constant 0 : index
    %c0_7 = arith.constant 0 : index
    %4 = vector.load %arg4[%c0_5, %c0_6, %c0_7] : memref<1x128x1xf32, #tpu.memory_space<vmem>>, vector<1x128x1xf32>
    %5 = vector.shape_cast %4 : vector<1x128x1xf32> to vector<128x1xf32>
    %c0_8 = arith.constant 0 : index
    %c0_9 = arith.constant 0 : index
    %6 = vector.load %arg5[%c0_8, %c0_9] : memref<128x4xbf16, #tpu.memory_space<vmem>>, vector<128x4xbf16>
    %cst = arith.constant dense<0.000000e+00> : vector<128x256xf32>
    %7 = tpu.matmul %6, %1, %cst {dimension_numbers = #tpu.dot_dimension_numbers<[1], [0], [0], [1], [0, 0, 1, 1], [], []>} : vector<128x4xbf16>, vector<4x256xbf16>, vector<128x256xf32> -> vector<128x256xf32>
    %8 = vector.broadcast %3 : vector<128x1xf32> to vector<128x256xf32>
    %9 = arith.mulf %7, %8 : vector<128x256xf32>
    %10 = vector.broadcast %5 : vector<128x1xf32> to vector<128x256xf32>
    %11 = arith.addf %9, %10 : vector<128x256xf32>
    %12 = arith.mulf %11, %11 : vector<128x256xf32>
    %13 = arith.mulf %11, %12 : vector<128x256xf32>
    %cst_10 = arith.constant 4.471500e-02 : f32
    %14 = vector.broadcast %cst_10 : f32 to vector<128x256xf32>
    %15 = arith.mulf %14, %13 : vector<128x256xf32>
    %16 = arith.addf %11, %15 : vector<128x256xf32>
    %cst_11 = arith.constant 0.797884583 : f32
    %17 = vector.broadcast %cst_11 : f32 to vector<128x256xf32>
    %18 = arith.mulf %17, %16 : vector<128x256xf32>
    %19 = math.tanh %18 : vector<128x256xf32>
    %cst_12 = arith.constant 1.000000e+00 : f32
    %20 = vector.broadcast %cst_12 : f32 to vector<128x256xf32>
    %21 = arith.addf %20, %19 : vector<128x256xf32>
    %cst_13 = arith.constant 5.000000e-01 : f32
    %22 = vector.broadcast %cst_13 : f32 to vector<128x256xf32>
    %23 = arith.mulf %22, %21 : vector<128x256xf32>
    %24 = arith.mulf %11, %23 : vector<128x256xf32>
    %25 = arith.truncf %24 : vector<128x256xf32> to vector<128x256xbf16>
    %c0_14 = arith.constant 0 : index
    %c0_15 = arith.constant 0 : index
    %26 = vector.load %arg6[%c0_14, %c0_15] : memref<128x128xbf16, #tpu.memory_space<vmem>>, vector<128x128xbf16>
    %cst_16 = arith.constant dense<0.000000e+00> : vector<128x256xf32>
    %27 = tpu.matmul %26, %25, %cst_16 {dimension_numbers = #tpu.dot_dimension_numbers<[1], [0], [0], [1], [0, 0, 1, 1], [], []>} : vector<128x128xbf16>, vector<128x256xbf16>, vector<128x256xf32> -> vector<128x256xf32>
    %28 = arith.addf %11, %27 : vector<128x256xf32>
    %c0_17 = arith.constant 0 : index
    %c0_18 = arith.constant 0 : index
    %29 = vector.load %arg8[%c0_17, %c0_18] : memref<128x1xf32, #tpu.memory_space<vmem>>, vector<128x1xf32>
    %30 = vector.broadcast %29 : vector<128x1xf32> to vector<128x256xf32>
    %31 = arith.addf %28, %30 : vector<128x256xf32>
    %32 = arith.mulf %31, %31 : vector<128x256xf32>
    %33 = arith.mulf %31, %32 : vector<128x256xf32>
    %cst_19 = arith.constant 4.471500e-02 : f32
    %34 = vector.broadcast %cst_19 : f32 to vector<128x256xf32>
    %35 = arith.mulf %34, %33 : vector<128x256xf32>
    %36 = arith.addf %31, %35 : vector<128x256xf32>
    %cst_20 = arith.constant 0.797884583 : f32
    %37 = vector.broadcast %cst_20 : f32 to vector<128x256xf32>
    %38 = arith.mulf %37, %36 : vector<128x256xf32>
    %39 = math.tanh %38 : vector<128x256xf32>
    %cst_21 = arith.constant 1.000000e+00 : f32
    %40 = vector.broadcast %cst_21 : f32 to vector<128x256xf32>
    %41 = arith.addf %40, %39 : vector<128x256xf32>
    %cst_22 = arith.constant 5.000000e-01 : f32
    %42 = vector.broadcast %cst_22 : f32 to vector<128x256xf32>
    %43 = arith.mulf %42, %41 : vector<128x256xf32>
    %44 = arith.mulf %31, %43 : vector<128x256xf32>
    %45 = arith.truncf %44 : vector<128x256xf32> to vector<128x256xbf16>
    %c0_23 = arith.constant 0 : index
    %c0_24 = arith.constant 0 : index
    %46 = vector.load %arg7[%c0_23, %c0_24] : memref<4x128xbf16, #tpu.memory_space<vmem>>, vector<4x128xbf16>
    %cst_25 = arith.constant dense<0.000000e+00> : vector<4x256xf32>
    %47 = tpu.matmul %46, %45, %cst_25 {dimension_numbers = #tpu.dot_dimension_numbers<[1], [0], [0], [1], [0, 0, 1, 1], [], []>} : vector<4x128xbf16>, vector<128x256xbf16>, vector<4x256xf32> -> vector<4x256xf32>
    %c0_26 = arith.constant 0 : index
    %c0_27 = arith.constant 0 : index
    %48 = vector.load %arg9[%c0_26, %c0_27] : memref<4x1xf32, #tpu.memory_space<vmem>>, vector<4x1xf32>
    %49 = vector.broadcast %48 : vector<4x1xf32> to vector<4x256xf32>
    %50 = arith.addf %47, %49 : vector<4x256xf32>
    %c0_28 = arith.constant 0 : index
    %c0_29 = arith.constant 0 : index
    %c0_30 = arith.constant 0 : index
    %51 = vector.load %arg10[%c0_28, %c0_29, %c0_30] : memref<1x4x256xf32, #tpu.memory_space<vmem>>, vector<1x4x256xf32>
    %52 = vector.shape_cast %51 : vector<1x4x256xf32> to vector<4x256xf32>
    %53 = vector.shape_cast %50 : vector<4x256xf32> to vector<1x4x256xf32>
    tpu.vector_store %arg10[%c0_28, %c0_29, %c0_30], %53 {strides = array<i32>} : memref<1x4x256xf32, #tpu.memory_space<vmem>>, vector<1x4x256xf32>,
    return
  }
  func.func @transform_0(%arg0: i32, %arg1: i32) -> (i32, i32, i32) {
    %c0_i32 = arith.constant 0 : i32
    %c0_i32_0 = arith.constant 0 : i32
    return %arg0, %c0_i32, %arg1 : i32, i32, i32
  }
  func.func @transform_1(%arg0: i32, %arg1: i32) -> (i32, i32, i32) {
    %c0_i32 = arith.constant 0 : i32
    %c0_i32_0 = arith.constant 0 : i32
    %c0_i32_1 = arith.constant 0 : i32
    return %arg0, %c0_i32, %c0_i32_0 : i32, i32, i32
  }
  func.func @transform_2(%arg0: i32, %arg1: i32) -> (i32, i32, i32) {
    %c0_i32 = arith.constant 0 : i32
    %c0_i32_0 = arith.constant 0 : i32
    %c0_i32_1 = arith.constant 0 : i32
    return %arg0, %c0_i32, %c0_i32_0 : i32, i32, i32
  }
  func.func @transform_3(%arg0: i32, %arg1: i32) -> (i32, i32) {
    %c0_i32 = arith.constant 0 : i32
    %c0_i32_0 = arith.constant 0 : i32
    %c0_i32_1 = arith.constant 0 : i32
    return %c0_i32, %c0_i32_0 : i32, i32
  }
  func.func @transform_4(%arg0: i32, %arg1: i32) -> (i32, i32) {
    %c0_i32 = arith.constant 0 : i32
    %c0_i32_0 = arith.constant 0 : i32
    %c0_i32_1 = arith.constant 0 : i32
    return %c0_i32, %c0_i32_0 : i32, i32
  }
  func.func @transform_5(%arg0: i32, %arg1: i32) -> (i32, i32) {
    %c0_i32 = arith.constant 0 : i32
    %c0_i32_0 = arith.constant 0 : i32
    %c0_i32_1 = arith.constant 0 : i32
    return %c0_i32, %c0_i32_0 : i32, i32
  }
  func.func @transform_6(%arg0: i32, %arg1: i32) -> (i32, i32) {
    %c0_i32 = arith.constant 0 : i32
    %c0_i32_0 = arith.constant 0 : i32
    %c0_i32_1 = arith.constant 0 : i32
    return %c0_i32, %c0_i32_0 : i32, i32
  }
  func.func @transform_7(%arg0: i32, %arg1: i32) -> (i32, i32) {
    %c0_i32 = arith.constant 0 : i32
    %c0_i32_0 = arith.constant 0 : i32
    %c0_i32_1 = arith.constant 0 : i32
    return %c0_i32, %c0_i32_0 : i32, i32
  }
  func.func @transform_8(%arg0: i32, %arg1: i32) -> (i32, i32, i32) {
    %c0_i32 = arith.constant 0 : i32
    %c0_i32_0 = arith.constant 0 : i32
    return %arg0, %c0_i32, %arg1 : i32, i32, i32
  }
}

</mosaic_0001>

<llo_original>
// kernel: tpu_custom_call.1
$region0: #{tpu_custom_call.1}
  #allocation0 [shape = 'u32[]', space=smem, size = 0x4, offset = 0x4, fixed_abs, tag = 'smem constant byte address 0x4 - core index']
  #allocation1 [shape = 'u32[72,128]{1,0:T(1,128)}', space=vmem, size = 0x9000, scoped, tag = 'internal scratch']
  %s0 = inlined_call_operand.vmem [shape: bf16[2,4,256], index: 0, kind: input, shape index: {}]
  %s1 = inlined_call_operand.vmem [shape: f32[2,128,1], index: 1, kind: input, shape index: {}]
  %s2 = inlined_call_operand.vmem [shape: f32[2,128,1], index: 2, kind: input, shape index: {}]
  %s3 = inlined_call_operand.vmem [shape: bf16[128,4], index: 3, kind: input, shape index: {}]
  %s4 = inlined_call_operand.vmem [shape: bf16[128,128], index: 4, kind: input, shape index: {}]
  %s5 = inlined_call_operand.vmem [shape: bf16[4,128], index: 5, kind: input, shape index: {}]
  %s6 = inlined_call_operand.vmem [shape: f32[128,1], index: 6, kind: input, shape index: {}]
  %s7 = inlined_call_operand.vmem [shape: f32[4,1], index: 7, kind: input, shape index: {}]
  %s8 = inlined_call_operand.hbm [shape: f32[2,4,256], index: 8, kind: output, shape index: {}]
  %s9 = sld [smem:[#allocation0]]
  $region65: #{tpu_custom_call.1} parent=0
    _
  %s11 = ssub.s32 1, %s9
  %s12 = scalar_select 0, %s11, %s9
  $region1: #{tpu_custom_call.1} parent=0
    #allocation2 [shape = 'u8[8192]{0}', space=vmem, size = 0x2000, scoped, tag = 'output window, operand 0']
    #allocation3 [shape = 's32[2]{0}', space=sflag, size = 0x8, scoped, tag = 'scoped memory for tpu_custom_call.1']
    %13 = vsyncpa [#allocation3], 0
    %s14 = scalar_lea.sflag [#allocation3], 1
    %15 = vsyncpa %s14, 0
    loop: start=0, step=1, limit=4
    $region2: #{tpu_custom_call.1} parent=1 // loop_pre_header
      _
    $region3: #{tpu_custom_call.1} parent=1 // loop_header
      %s17 = sphi 0, %s21
      %p18 = scmp.ge.s32.totalorder %s17, 4
      %s24 = sphi 0, %s36
      %s25 = sphi 0, %s32
      %s26 = sphi 0, %s24
      %s27 = sphi 0, %s25
      %s28 = sphi 0, %s26
      %s29 = sphi 0, %s27
      %s41 = sphi 0, %s43
      %s44 = sphi 0, %s41
      %s45 = sphi 0, %s44
      %s61 = sphi 0, %s45
      %s67 = sphi 0, %s69
      %s70 = sphi 0, %s67
      %s71 = sphi 0, %s70
      %s87 = sphi 0, %s71
      %s93 = sphi 0, %s95
      %s96 = sphi 0, %s93
      %s97 = sphi 0, %s96
      %s113 = sphi 0, %s97
      %s117 = sphi 0, %s117
      %s119 = sphi 0, %s117
      %s120 = sphi 0, %s119
      %s134 = sphi 0, %s120
      %s138 = sphi 0, %s138
      %s140 = sphi 0, %s138
      %s141 = sphi 0, %s140
      %s155 = sphi 0, %s141
      %s159 = sphi 0, %s159
      %s161 = sphi 0, %s159
      %s162 = sphi 0, %s161
      %s176 = sphi 0, %s162
      %s180 = sphi 0, %s180
      %s182 = sphi 0, %s180
      %s183 = sphi 0, %s182
      %s197 = sphi 0, %s183
      %s201 = sphi 0, %s201
      %s203 = sphi 0, %s201
      %s204 = sphi 0, %s203
      %s218 = sphi 0, %s204
      %s226 = sphi 0, %s228
      %s229 = sphi 0, %s226
      %s230 = sphi 0, %s229
      %s246 = sphi 0, %s230
    $region4: #{tpu_custom_call.1} parent=1 // loop_header_branch
      %20 = sbr.rel (%p18) target = $region8
    $region5: #{tpu_custom_call.1} parent=1 // loop_body
      %s22 = ssub.s32 %s17, 1
      %s23 = ssub.s32 %s17, 2
      %s30 = sadd.s32 1, %s25
      %p31 = scmp.ge.s32.totalorder %s30, 1
      %s32 = scalar_select %p31, 0, %s30
      %s33 = sadd.s32 1, %s24
      %s34 = scalar_select %p31, %s33, %s24
      %p35 = scmp.ge.s32.totalorder %s34, 2
      %s36 = scalar_select %p35, 0, %s34
      %s37 = ssub.s32 %s24, %s36
      %s38 = ssub.s32 %s25, %s32
      %s39 = sor.u32 %s37, %s38
      %p40 = scmp.eq.s32.totalorder %s39, 0
      %s42 = sadd.s32 %s41, 1
      %s43 = scalar_select %p40, %s41, %s42
      %p46 = pneg %p40
      %p47 = scmp.eq.s32.totalorder %s17, 1
      %p48 = por %p46, %p47
      %p49 = scmp.ne.s32.totalorder %s41, %s44
      %p50 = scmp.eq.s32.totalorder %s17, 0
      %p51 = por %p49, %p50
      %p52 = scmp.ne.s32.totalorder %s41, %s44
      %p53 = scmp.eq.s32.totalorder %s22, 1
      %p54 = por %p52, %p53
      %p55 = scmp.ne.s32.totalorder %s44, %s45
      %p56 = scmp.eq.s32.totalorder %s22, 0
      %p57 = por %p55, %p56
      %p58 = scmp.ne.s32.totalorder %s44, %s45
      %p59 = scmp.eq.s32.totalorder %s23, 1
      %p60 = por %p58, %p59
      %p62 = scmp.ne.s32.totalorder %s45, %s61
      %p63 = scmp.eq.s32.totalorder %s23, 0
      %p64 = por %p62, %p63
      %s65 = ssub.s32 %s24, %s36
      %p66 = scmp.eq.s32.totalorder %s65, 0
      %s68 = sadd.s32 %s67, 1
      %s69 = scalar_select %p66, %s67, %s68
      %p72 = pneg %p66
      %p73 = scmp.eq.s32.totalorder %s17, 1
      %p74 = por %p72, %p73
      %p75 = scmp.ne.s32.totalorder %s67, %s70
      %p76 = scmp.eq.s32.totalorder %s17, 0
      %p77 = por %p75, %p76
      %p78 = scmp.ne.s32.totalorder %s67, %s70
      %p79 = scmp.eq.s32.totalorder %s22, 1
      %p80 = por %p78, %p79
      %p81 = scmp.ne.s32.totalorder %s70, %s71
      %p82 = scmp.eq.s32.totalorder %s22, 0
      %p83 = por %p81, %p82
      %p84 = scmp.ne.s32.totalorder %s70, %s71
      %p85 = scmp.eq.s32.totalorder %s23, 1
      %p86 = por %p84, %p85
      %p88 = scmp.ne.s32.totalorder %s71, %s87
      %p89 = scmp.eq.s32.totalorder %s23, 0
      %p90 = por %p88, %p89
      %s91 = ssub.s32 %s24, %s36
      %p92 = scmp.eq.s32.totalorder %s91, 0
      %s94 = sadd.s32 %s93, 1
      %s95 = scalar_select %p92, %s93, %s94
      %p98 = pneg %p92
      %p99 = scmp.eq.s32.totalorder %s17, 1
      %p100 = por %p98, %p99
      %p101 = scmp.ne.s32.totalorder %s93, %s96
      %p102 = scmp.eq.s32.totalorder %s17, 0
      %p103 = por %p101, %p102
      %p104 = scmp.ne.s32.totalorder %s93, %s96
      %p105 = scmp.eq.s32.totalorder %s22, 1
      %p106 = por %p104, %p105
      %p107 = scmp.ne.s32.totalorder %s96, %s97
      %p108 = scmp.eq.s32.totalorder %s22, 0
      %p109 = por %p107, %p108
      %p110 = scmp.ne.s32.totalorder %s96, %s97
      %p111 = scmp.eq.s32.totalorder %s23, 1
      %p112 = por %p110, %p111
      %p114 = scmp.ne.s32.totalorder %s97, %s113
      %p115 = scmp.eq.s32.totalorder %s23, 0
      %p116 = por %p114, %p115
      %s118 = sadd.s32 %s117, 1
      %p121 = scmp.eq.s32.totalorder %s17, 1
      %p122 = scmp.ne.s32.totalorder %s117, %s119
      %p123 = scmp.eq.s32.totalorder %s17, 0
      %p124 = por %p122, %p123
      %p125 = scmp.ne.s32.totalorder %s117, %s119
      %p126 = scmp.eq.s32.totalorder %s22, 1
      %p127 = por %p125, %p126
      %p128 = scmp.ne.s32.totalorder %s119, %s120
      %p129 = scmp.eq.s32.totalorder %s22, 0
      %p130 = por %p128, %p129
      %p131 = scmp.ne.s32.totalorder %s119, %s120
      %p132 = scmp.eq.s32.totalorder %s23, 1
      %p133 = por %p131, %p132
      %p135 = scmp.ne.s32.totalorder %s120, %s134
      %p136 = scmp.eq.s32.totalorder %s23, 0
      %p137 = por %p135, %p136
      %s139 = sadd.s32 %s138, 1
      %p142 = scmp.eq.s32.totalorder %s17, 1
      %p143 = scmp.ne.s32.totalorder %s138, %s140
      %p144 = scmp.eq.s32.totalorder %s17, 0
      %p145 = por %p143, %p144
      %p146 = scmp.ne.s32.totalorder %s138, %s140
      %p147 = scmp.eq.s32.totalorder %s22, 1
      %p148 = por %p146, %p147
      %p149 = scmp.ne.s32.totalorder %s140, %s141
      %p150 = scmp.eq.s32.totalorder %s22, 0
      %p151 = por %p149, %p150
      %p152 = scmp.ne.s32.totalorder %s140, %s141
      %p153 = scmp.eq.s32.totalorder %s23, 1
      %p154 = por %p152, %p153
      %p156 = scmp.ne.s32.totalorder %s141, %s155
      %p157 = scmp.eq.s32.totalorder %s23, 0
      %p158 = por %p156, %p157
      %s160 = sadd.s32 %s159, 1
      %p163 = scmp.eq.s32.totalorder %s17, 1
      %p164 = scmp.ne.s32.totalorder %s159, %s161
      %p165 = scmp.eq.s32.totalorder %s17, 0
      %p166 = por %p164, %p165
      %p167 = scmp.ne.s32.totalorder %s159, %s161
      %p168 = scmp.eq.s32.totalorder %s22, 1
      %p169 = por %p167, %p168
      %p170 = scmp.ne.s32.totalorder %s161, %s162
      %p171 = scmp.eq.s32.totalorder %s22, 0
      %p172 = por %p170, %p171
      %p173 = scmp.ne.s32.totalorder %s161, %s162
      %p174 = scmp.eq.s32.totalorder %s23, 1
      %p175 = por %p173, %p174
      %p177 = scmp.ne.s32.totalorder %s162, %s176
      %p178 = scmp.eq.s32.totalorder %s23, 0
      %p179 = por %p177, %p178
      %s181 = sadd.s32 %s180, 1
      %p184 = scmp.eq.s32.totalorder %s17, 1
      %p185 = scmp.ne.s32.totalorder %s180, %s182
      %p186 = scmp.eq.s32.totalorder %s17, 0
      %p187 = por %p185, %p186
      %p188 = scmp.ne.s32.totalorder %s180, %s182
      %p189 = scmp.eq.s32.totalorder %s22, 1
      %p190 = por %p188, %p189
      %p191 = scmp.ne.s32.totalorder %s182, %s183
      %p192 = scmp.eq.s32.totalorder %s22, 0
      %p193 = por %p191, %p192
      %p194 = scmp.ne.s32.totalorder %s182, %s183
      %p195 = scmp.eq.s32.totalorder %s23, 1
      %p196 = por %p194, %p195
      %p198 = scmp.ne.s32.totalorder %s183, %s197
      %p199 = scmp.eq.s32.totalorder %s23, 0
      %p200 = por %p198, %p199
      %s202 = sadd.s32 %s201, 1
      %p205 = scmp.eq.s32.totalorder %s17, 1
      %p206 = scmp.ne.s32.totalorder %s201, %s203
      %p207 = scmp.eq.s32.totalorder %s17, 0
      %p208 = por %p206, %p207
      %p209 = scmp.ne.s32.totalorder %s201, %s203
      %p210 = scmp.eq.s32.totalorder %s22, 1
      %p211 = por %p209, %p210
      %p212 = scmp.ne.s32.totalorder %s203, %s204
      %p213 = scmp.eq.s32.totalorder %s22, 0
      %p214 = por %p212, %p213
      %p215 = scmp.ne.s32.totalorder %s203, %s204
      %p216 = scmp.eq.s32.totalorder %s23, 1
      %p217 = por %p215, %p216
      %p219 = scmp.ne.s32.totalorder %s204, %s218
      %p220 = scmp.eq.s32.totalorder %s23, 0
      %p221 = por %p219, %p220
      %s222 = ssub.s32 %s24, %s36
      %s223 = ssub.s32 %s25, %s32
      %s224 = sor.u32 %s222, %s223
      %p225 = scmp.eq.s32.totalorder %s224, 0
      %s227 = sadd.s32 %s226, 1
      %s228 = scalar_select %p225, %s226, %s227
      %p231 = pneg %p225
      %p232 = scmp.eq.s32.totalorder %s17, 1
      %p233 = por %p231, %p232
      %p234 = scmp.ne.s32.totalorder %s226, %s229
      %p235 = scmp.eq.s32.totalorder %s17, 0
      %p236 = por %p234, %p235
      %p237 = scmp.ne.s32.totalorder %s226, %s229
      %p238 = scmp.eq.s32.totalorder %s22, 1
      %p239 = por %p237, %p238
      %p240 = scmp.ne.s32.totalorder %s229, %s230
      %p241 = scmp.eq.s32.totalorder %s22, 0
      %p242 = por %p240, %p241
      %p243 = scmp.ne.s32.totalorder %s229, %s230
      %p244 = scmp.eq.s32.totalorder %s23, 1
      %p245 = por %p243, %p244
      %p247 = scmp.ne.s32.totalorder %s230, %s246
      %p248 = scmp.eq.s32.totalorder %s23, 0
      %p249 = por %p247, %p248
      %p250 = scmp.le.s32.totalorder 1, %s17
      %p251 = scmp.lt.s32.totalorder %s17, 3
      %p252 = pnand %p250, %p251
      %p253 = pneg %p252
      // Predicated region
      $region9: #{tpu_custom_call.1} parent=5 // pred_check
        _
      $region10: #{tpu_custom_call.1} parent=5 // pred_check_branch
        %255 = sbr.rel (%p252) target = $region12
      $region11: #{tpu_custom_call.1} parent=5 // pred_region
        %s256 = ssub.s32 %s17, 1
        // Predicated region
        $region13: #{tpu_custom_call.1} parent=11 // pred_check
          %p257 = pneg %p130
        $region14: #{tpu_custom_call.1} parent=11 // pred_check_branch
          %259 = sbr.rel (%p257) target = $region16
        $region15: #{tpu_custom_call.1} parent=11 // pred_region
          _
        $region16: #{tpu_custom_call.1} parent=11 // pred_fallthru
          _
        // Predicated region
        $region17: #{tpu_custom_call.1} parent=11 // pred_check
          %p260 = pneg %p151
        $region18: #{tpu_custom_call.1} parent=11 // pred_check_branch
          %262 = sbr.rel (%p260) target = $region20
        $region19: #{tpu_custom_call.1} parent=11 // pred_region
          _
        $region20: #{tpu_custom_call.1} parent=11 // pred_fallthru
          _
        // Predicated region
        $region21: #{tpu_custom_call.1} parent=11 // pred_check
          %p263 = pneg %p172
        $region22: #{tpu_custom_call.1} parent=11 // pred_check_branch
          %265 = sbr.rel (%p263) target = $region24
        $region23: #{tpu_custom_call.1} parent=11 // pred_region
          _
        $region24: #{tpu_custom_call.1} parent=11 // pred_fallthru
          _
        // Predicated region
        $region25: #{tpu_custom_call.1} parent=11 // pred_check
          %p266 = pneg %p193
        $region26: #{tpu_custom_call.1} parent=11 // pred_check_branch
          %268 = sbr.rel (%p266) target = $region28
        $region27: #{tpu_custom_call.1} parent=11 // pred_region
          _
        $region28: #{tpu_custom_call.1} parent=11 // pred_fallthru
          _
        // Predicated region
        $region29: #{tpu_custom_call.1} parent=11 // pred_check
          %p269 = pneg %p214
        $region30: #{tpu_custom_call.1} parent=11 // pred_check_branch
          %271 = sbr.rel (%p269) target = $region32
        $region31: #{tpu_custom_call.1} parent=11 // pred_region
          _
        $region32: #{tpu_custom_call.1} parent=11 // pred_fallthru
          _
      $region12: #{tpu_custom_call.1} parent=5 // pred_fallthru
        _
      %p272 = scmp.lt.s32.totalorder %s17, 2
      // Predicated region
      $region33: #{tpu_custom_call.1} parent=5 // pred_check
        %p273 = pneg %p272
      $region34: #{tpu_custom_call.1} parent=5 // pred_check_branch
        %275 = sbr.rel (%p273) target = $region36
      $region35: #{tpu_custom_call.1} parent=5 // pred_region
        // Predicated region
        $region37: #{tpu_custom_call.1} parent=35 // pred_check
          %p276 = pneg %p51
        $region38: #{tpu_custom_call.1} parent=35 // pred_check_branch
          %278 = sbr.rel (%p276) target = $region40
        $region39: #{tpu_custom_call.1} parent=35 // pred_region
          %s279 = smul.u32 2, %s25
          %p280 = scmp.lt.s32.totalorder %s24, 1
          %s281 = scalar_select %p280, %s24, 1
          %p282 = scmp.lt.s32.totalorder %s279, 1
          %s283 = scalar_select %p282, %s279, 1
          %s284 = smul.addr %s281, 2
          %s285 = sadd.s32 %s283, %s284
          %s286 = smul.addr %s285, 2
          %s287 = scalar_lea.vmem %s0, %s286
          %s288 = smul.u32 2, %s25
        $region40: #{tpu_custom_call.1} parent=35 // pred_fallthru
          _
        // Predicated region
        $region41: #{tpu_custom_call.1} parent=35 // pred_check
          %p289 = pneg %p77
        $region42: #{tpu_custom_call.1} parent=35 // pred_check_branch
          %291 = sbr.rel (%p289) target = $region44
        $region43: #{tpu_custom_call.1} parent=35 // pred_region
          %p292 = scmp.lt.s32.totalorder %s24, 1
          %s293 = scalar_select %p292, %s24, 1
          %s294 = smul.addr %s293, 16
          %s295 = smul.addr %s294, 8
          %s296 = scalar_lea.vmem %s1, %s295
        $region44: #{tpu_custom_call.1} parent=35 // pred_fallthru
          _
        // Predicated region
        $region45: #{tpu_custom_call.1} parent=35 // pred_check
          %p297 = pneg %p103
        $region46: #{tpu_custom_call.1} parent=35 // pred_check_branch
          %299 = sbr.rel (%p297) target = $region48
        $region47: #{tpu_custom_call.1} parent=35 // pred_region
          %p300 = scmp.lt.s32.totalorder %s24, 1
          %s301 = scalar_select %p300, %s24, 1
          %s302 = smul.addr %s301, 16
          %s303 = smul.addr %s302, 8
          %s304 = scalar_lea.vmem %s2, %s303
        $region48: #{tpu_custom_call.1} parent=35 // pred_fallthru
          _
      $region36: #{tpu_custom_call.1} parent=5 // pred_fallthru
        _
      %p305 = scmp.le.s32.totalorder 1, %s17
      %p306 = scmp.lt.s32.totalorder %s17, 3
      %p307 = pnand %p305, %p306
      %p308 = pneg %p307
      // Predicated region
      $region49: #{tpu_custom_call.1} parent=5 // pred_check
        _
      $region50: #{tpu_custom_call.1} parent=5 // pred_check_branch
        %310 = sbr.rel (%p307) target = $region52
      $region51: #{tpu_custom_call.1} parent=5 // pred_region
        %s311 = ssub.s32 %s17, 1
        %s312 = smul.u32 2, %s27
        %p313 = scmp.lt.s32.totalorder %s26, 1
        %s314 = scalar_select %p313, %s26, 1
        %p315 = scmp.lt.s32.totalorder %s312, 1
        %s316 = scalar_select %p315, %s312, 1
        %s317 = smul.addr %s314, 2
        %s318 = sadd.s32 %s316, %s317
        %s319 = smul.addr %s318, 2
        %s320 = scalar_lea.vmem %s0, %s319
        %p321 = pneg %p57
        %p322 = pneg %p54
        %p323 = scmp.lt.s32.totalorder %s26, 1
        %s324 = scalar_select %p323, %s26, 1
        %s325 = smul.addr %s324, 16
        %s326 = smul.addr %s325, 8
        %s327 = scalar_lea.vmem %s1, %s326
        %p328 = pneg %p83
        %p329 = pneg %p80
        %p330 = scmp.lt.s32.totalorder %s26, 1
        %s331 = scalar_select %p330, %s26, 1
        %s332 = smul.addr %s331, 16
        %s333 = smul.addr %s332, 8
        %s334 = scalar_lea.vmem %s2, %s333
        %p335 = pneg %p109
        %p336 = pneg %p106
        %p337 = pneg %p130
        %p338 = pneg %p127
        %p339 = pneg %p151
        %p340 = pneg %p148
        %p341 = pneg %p172
        %p342 = pneg %p169
        %p343 = pneg %p193
        %p344 = pneg %p190
        %p345 = pneg %p214
        %p346 = pneg %p211
        %p347 = pneg %p242
        %p348 = pneg %p239
        %s349 = sand.u32 %s229, 1
        %s350 = scalar_lea.sflag [#allocation3], %s349
        %s351 = sand.u32 %s229, 1
        %s352 = smul.addr %s351, 8
        %s353 = scalar_lea.vmem [#allocation2], %s352
        %s354 = smul.u32 2, %s27
        %p355 = scmp.lt.s32.totalorder %s26, 1
        %s356 = scalar_select %p355, %s26, 1
        %p357 = scmp.lt.s32.totalorder %s354, 1
        %s358 = scalar_select %p357, %s354, 1
        %s359 = smul.addr %s356, 2
        %s360 = sadd.s32 %s358, %s359
        %s361 = smul.addr %s360, 2
        %s362 = scalar_lea.vmem %s0, %s361
        %s363 = smul.u32 2, %s27
        %p364 = scmp.lt.s32.totalorder %s26, 1
        %s365 = scalar_select %p364, %s26, 1
        %s366 = smul.addr %s365, 16
        %s367 = smul.addr %s366, 8
        %s368 = scalar_lea.vmem %s1, %s367
        %p369 = scmp.lt.s32.totalorder %s26, 1
        %s370 = scalar_select %p369, %s26, 1
        %s371 = smul.addr %s370, 16
        %s372 = smul.addr %s371, 8
        %s373 = scalar_lea.vmem %s2, %s372
        %s374 = smul.u32 2, %s27
        %v376 = vld [vmem:[%s362] sm:$0xf]
        %v377 = vld [vmem:[%s368] sm:$0xff]
        %v378 = vld [vmem:[%s368 + $0x8] sm:$0xff]
        %v379 = vld [vmem:[%s368 + $0x10] sm:$0xff]
        %v380 = vld [vmem:[%s368 + $0x18] sm:$0xff]
        %v381 = vld [vmem:[%s368 + $0x20] sm:$0xff]
        %v382 = vld [vmem:[%s368 + $0x28] sm:$0xff]
        %v383 = vld [vmem:[%s368 + $0x30] sm:$0xff]
        %v384 = vld [vmem:[%s368 + $0x38] sm:$0xff]
        %v385 = vld [vmem:[%s368 + $0x40] sm:$0xff]
        %v386 = vld [vmem:[%s368 + $0x48] sm:$0xff]
        %v387 = vld [vmem:[%s368 + $0x50] sm:$0xff]
        %v388 = vld [vmem:[%s368 + $0x58] sm:$0xff]
        %v389 = vld [vmem:[%s368 + $0x60] sm:$0xff]
        %v390 = vld [vmem:[%s368 + $0x68] sm:$0xff]
        %v391 = vld [vmem:[%s368 + $0x70] sm:$0xff]
        %v392 = vld [vmem:[%s368 + $0x78] sm:$0xff]
        %v393 = vld [vmem:[%s373] sm:$0xff]
        %v394 = vld [vmem:[%s373 + $0x8] sm:$0xff]
        %v395 = vld [vmem:[%s373 + $0x10] sm:$0xff]
        %v396 = vld [vmem:[%s373 + $0x18] sm:$0xff]
        %v397 = vld [vmem:[%s373 + $0x20] sm:$0xff]
        %v398 = vld [vmem:[%s373 + $0x28] sm:$0xff]
        %v399 = vld [vmem:[%s373 + $0x30] sm:$0xff]
        %v400 = vld [vmem:[%s373 + $0x38] sm:$0xff]
        %v401 = vld [vmem:[%s373 + $0x40] sm:$0xff]
        %v402 = vld [vmem:[%s373 + $0x48] sm:$0xff]
        %v403 = vld [vmem:[%s373 + $0x50] sm:$0xff]
        %v404 = vld [vmem:[%s373 + $0x58] sm:$0xff]
        %v405 = vld [vmem:[%s373 + $0x60] sm:$0xff]
        %v406 = vld [vmem:[%s373 + $0x68] sm:$0xff]
        %v407 = vld [vmem:[%s373 + $0x70] sm:$0xff]
        %v408 = vld [vmem:[%s373 + $0x78] sm:$0xff]
        %v409 = vld [vmem:[%s3] sm:$0xf]
        %v410 = vld [vmem:[%s3 + $0x4] sm:$0xf]
        %v411 = vld [vmem:[%s3 + $0x8] sm:$0xf]
        %v412 = vld [vmem:[%s3 + $0xc] sm:$0xf]
        %v413 = vld [vmem:[%s3 + $0x10] sm:$0xf]
        %v414 = vld [vmem:[%s3 + $0x14] sm:$0xf]
        %v415 = vld [vmem:[%s3 + $0x18] sm:$0xf]
        %v416 = vld [vmem:[%s3 + $0x1c] sm:$0xf]
        %v417 = vld [vmem:[%s3 + $0x20] sm:$0xf]
        %v418 = vld [vmem:[%s3 + $0x24] sm:$0xf]
        %v419 = vld [vmem:[%s3 + $0x28] sm:$0xf]
        %v420 = vld [vmem:[%s3 + $0x2c] sm:$0xf]
        %v421 = vld [vmem:[%s3 + $0x30] sm:$0xf]
        %v422 = vld [vmem:[%s3 + $0x34] sm:$0xf]
        %v423 = vld [vmem:[%s3 + $0x38] sm:$0xf]
        %v424 = vld [vmem:[%s3 + $0x3c] sm:$0xf]
        %v441 = vunpack.c.l.b16 %v409
        %v442 = vunpack.c.l.b16 %v410
        %v443 = vunpack.c.l.b16 %v411
        %v444 = vunpack.c.l.b16 %v412
        %v445 = vunpack.c.l.b16 %v413
        %v446 = vunpack.c.l.b16 %v414
        %v447 = vunpack.c.l.b16 %v415
        %v448 = vunpack.c.l.b16 %v416
        %v449 = vunpack.c.l.b16 %v417
        %v450 = vunpack.c.l.b16 %v418
        %v451 = vunpack.c.l.b16 %v419
        %v452 = vunpack.c.l.b16 %v420
        %v453 = vunpack.c.l.b16 %v421
        %v454 = vunpack.c.l.b16 %v422
        %v455 = vunpack.c.l.b16 %v423
        %v456 = vunpack.c.l.b16 %v424
        %v457 = vpack.c.b16 %v442, %v441
        %v458 = vpack.c.b16 %v444, %v443
        %v459 = vpack.c.b16 %v446, %v445
        %v460 = vpack.c.b16 %v448, %v447
        %v461 = vpack.c.b16 %v450, %v449
        %v462 = vpack.c.b16 %v452, %v451
        %v463 = vpack.c.b16 %v454, %v453
        %v464 = vpack.c.b16 %v456, %v455
        %466 = vst [vmem:[#allocation1] ss:$4 sm:$0xff] %v376
        %v467 = vld.sshfl [vmem:[#allocation1] sm:$0xff pattern:$0x73625140]
        %v468 = vld.sshfl [vmem:[#allocation1 + $0x8] sm:$0xff pattern:$0x73625140]
        %vm469 = vcmask 31744
        %v471 = vsel %vm469, %v457, 0
        %v474 = vsel %vm469, %v458, 0
        %v477 = vsel %vm469, %v459, 0
        %v480 = vsel %vm469, %v460, 0
        %v483 = vsel %vm469, %v461, 0
        %v486 = vsel %vm469, %v462, 0
        %v489 = vsel %vm469, %v463, 0
        %v492 = vsel %vm469, %v464, 0
        %vm494 = vcmask 1041408
        %v495 = vsel %vm494, %v467, 0
        %v497 = vsel %vm494, %v468, 0
        %499 = vmatpush.bf16.msra.mxu0 0
        %500 = vmatpush.bf16.msra.mxu0 0
        %501 = vmatpush.bf16.msra.mxu0 0
        %502 = vmatpush.bf16.msra.mxu0 0
        %503 = vmatpush.bf16.msra.mxu0 0
        %504 = vmatpush.bf16.msra.mxu0 0
        %505 = vmatpush.bf16.msra.mxu0 0
        %506 = vmatpush.bf16.msra.mxu0 %v495
        %507 = vmatmul.bf16.gmra.mxu0 %v471
        %v508 = vpop.f32.mrf.mxu0
        %v509 = vadd.f32 0.0, %v508
        %v510 = vpop.f32.mrf.mxu0
        %v511 = vadd.f32 0.0, %v510
        %512 = vmatmul.bf16.gmra.mxu0 %v474
        %v513 = vpop.f32.mrf.mxu0
        %v514 = vadd.f32 0.0, %v513
        %v515 = vpop.f32.mrf.mxu0
        %v516 = vadd.f32 0.0, %v515
        %517 = vmatmul.bf16.gmra.mxu0 %v477
        %v518 = vpop.f32.mrf.mxu0
        %v519 = vadd.f32 0.0, %v518
        %v520 = vpop.f32.mrf.mxu0
        %v521 = vadd.f32 0.0, %v520
        %522 = vmatmul.bf16.gmra.mxu0 %v480
        %v523 = vpop.f32.mrf.mxu0
        %v524 = vadd.f32 0.0, %v523
        %v525 = vpop.f32.mrf.mxu0
        %v526 = vadd.f32 0.0, %v525
        %527 = vmatmul.bf16.gmra.mxu0 %v483
        %v528 = vpop.f32.mrf.mxu0
        %v529 = vadd.f32 0.0, %v528
        %v530 = vpop.f32.mrf.mxu0
        %v531 = vadd.f32 0.0, %v530
        %532 = vmatmul.bf16.gmra.mxu0 %v486
        %v533 = vpop.f32.mrf.mxu0
        %v534 = vadd.f32 0.0, %v533
        %v535 = vpop.f32.mrf.mxu0
        %v536 = vadd.f32 0.0, %v535
        %537 = vmatmul.bf16.gmra.mxu0 %v489
        %v538 = vpop.f32.mrf.mxu0
        %v539 = vadd.f32 0.0, %v538
        %v540 = vpop.f32.mrf.mxu0
        %v541 = vadd.f32 0.0, %v540
        %542 = vmatmul.bf16.gmra.mxu0 %v492
        %v543 = vpop.f32.mrf.mxu0
        %v544 = vadd.f32 0.0, %v543
        %v545 = vpop.f32.mrf.mxu0
        %v546 = vadd.f32 0.0, %v545
        %547 = vdwg.mxu0
        %548 = vmatpush.bf16.msra.mxu0 0
        %549 = vmatpush.bf16.msra.mxu0 0
        %550 = vmatpush.bf16.msra.mxu0 0
        %551 = vmatpush.bf16.msra.mxu0 0
        %552 = vmatpush.bf16.msra.mxu0 0
        %553 = vmatpush.bf16.msra.mxu0 0
        %554 = vmatpush.bf16.msra.mxu0 0
        %555 = vmatpush.bf16.msra.mxu0 %v497
        %556 = vmatmul.bf16.gmra.mxu0 %v471
        %v557 = vpop.f32.mrf.mxu0
        %v558 = vadd.f32 0.0, %v557
        %v559 = vpop.f32.mrf.mxu0
        %v560 = vadd.f32 0.0, %v559
        %561 = vmatmul.bf16.gmra.mxu0 %v474
        %v562 = vpop.f32.mrf.mxu0
        %v563 = vadd.f32 0.0, %v562
        %v564 = vpop.f32.mrf.mxu0
        %v565 = vadd.f32 0.0, %v564
        %566 = vmatmul.bf16.gmra.mxu0 %v477
        %v567 = vpop.f32.mrf.mxu0
        %v568 = vadd.f32 0.0, %v567
        %v569 = vpop.f32.mrf.mxu0
        %v570 = vadd.f32 0.0, %v569
        %571 = vmatmul.bf16.gmra.mxu0 %v480
        %v572 = vpop.f32.mrf.mxu0
        %v573 = vadd.f32 0.0, %v572
        %v574 = vpop.f32.mrf.mxu0
        %v575 = vadd.f32 0.0, %v574
        %576 = vmatmul.bf16.gmra.mxu0 %v483
        %v577 = vpop.f32.mrf.mxu0
        %v578 = vadd.f32 0.0, %v577
        %v579 = vpop.f32.mrf.mxu0
        %v580 = vadd.f32 0.0, %v579
        %581 = vmatmul.bf16.gmra.mxu0 %v486
        %v582 = vpop.f32.mrf.mxu0
        %v583 = vadd.f32 0.0, %v582
        %v584 = vpop.f32.mrf.mxu0
        %v585 = vadd.f32 0.0, %v584
        %586 = vmatmul.bf16.gmra.mxu0 %v489
        %v587 = vpop.f32.mrf.mxu0
        %v588 = vadd.f32 0.0, %v587
        %v589 = vpop.f32.mrf.mxu0
        %v590 = vadd.f32 0.0, %v589
        %591 = vmatmul.bf16.gmra.mxu0 %v492
        %v592 = vpop.f32.mrf.mxu0
        %v593 = vadd.f32 0.0, %v592
        %v594 = vpop.f32.mrf.mxu0
        %v595 = vadd.f32 0.0, %v594
        %596 = vdwg.mxu0
        %598 = vset.pattern.permute.xlu0 0
        %599 = vperm.xlu0 %598, %v377
        %v600 = vpop.permute.xlu0 %599
        %603 = vset.pattern.permute.xlu0 0
        %604 = vperm.xlu0 %603, %v378
        %v605 = vpop.permute.xlu0 %604
        %608 = vset.pattern.permute.xlu0 0
        %609 = vperm.xlu0 %608, %v379
        %v610 = vpop.permute.xlu0 %609
        %613 = vset.pattern.permute.xlu0 0
        %614 = vperm.xlu0 %613, %v380
        %v615 = vpop.permute.xlu0 %614
        %618 = vset.pattern.permute.xlu0 0
        %619 = vperm.xlu0 %618, %v381
        %v620 = vpop.permute.xlu0 %619
        %623 = vset.pattern.permute.xlu0 0
        %624 = vperm.xlu0 %623, %v382
        %v625 = vpop.permute.xlu0 %624
        %628 = vset.pattern.permute.xlu0 0
        %629 = vperm.xlu0 %628, %v383
        %v630 = vpop.permute.xlu0 %629
        %633 = vset.pattern.permute.xlu0 0
        %634 = vperm.xlu0 %633, %v384
        %v635 = vpop.permute.xlu0 %634
        %638 = vset.pattern.permute.xlu0 0
        %639 = vperm.xlu0 %638, %v385
        %v640 = vpop.permute.xlu0 %639
        %643 = vset.pattern.permute.xlu0 0
        %644 = vperm.xlu0 %643, %v386
        %v645 = vpop.permute.xlu0 %644
        %648 = vset.pattern.permute.xlu0 0
        %649 = vperm.xlu0 %648, %v387
        %v650 = vpop.permute.xlu0 %649
        %653 = vset.pattern.permute.xlu0 0
        %654 = vperm.xlu0 %653, %v388
        %v655 = vpop.permute.xlu0 %654
        %658 = vset.pattern.permute.xlu0 0
        %659 = vperm.xlu0 %658, %v389
        %v660 = vpop.permute.xlu0 %659
        %663 = vset.pattern.permute.xlu0 0
        %664 = vperm.xlu0 %663, %v390
        %v665 = vpop.permute.xlu0 %664
        %668 = vset.pattern.permute.xlu0 0
        %669 = vperm.xlu0 %668, %v391
        %v670 = vpop.permute.xlu0 %669
        %673 = vset.pattern.permute.xlu0 0
        %674 = vperm.xlu0 %673, %v392
        %v675 = vpop.permute.xlu0 %674
        %v677 = vmul.f32 %v509, %v600
        %v678 = vmul.f32 %v558, %v600
        %v679 = vmul.f32 %v511, %v605
        %v680 = vmul.f32 %v560, %v605
        %v681 = vmul.f32 %v514, %v610
        %v682 = vmul.f32 %v563, %v610
        %v683 = vmul.f32 %v516, %v615
        %v684 = vmul.f32 %v565, %v615
        %v685 = vmul.f32 %v519, %v620
        %v686 = vmul.f32 %v568, %v620
        %v687 = vmul.f32 %v521, %v625
        %v688 = vmul.f32 %v570, %v625
        %v689 = vmul.f32 %v524, %v630
        %v690 = vmul.f32 %v573, %v630
        %v691 = vmul.f32 %v526, %v635
        %v692 = vmul.f32 %v575, %v635
        %v693 = vmul.f32 %v529, %v640
        %v694 = vmul.f32 %v578, %v640
        %v695 = vmul.f32 %v531, %v645
        %v696 = vmul.f32 %v580, %v645
        %v697 = vmul.f32 %v534, %v650
        %v698 = vmul.f32 %v583, %v650
        %v699 = vmul.f32 %v536, %v655
        %v700 = vmul.f32 %v585, %v655
        %v701 = vmul.f32 %v539, %v660
        %v702 = vmul.f32 %v588, %v660
        %v703 = vmul.f32 %v541, %v665
        %v704 = vmul.f32 %v590, %v665
        %v705 = vmul.f32 %v544, %v670
        %v706 = vmul.f32 %v593, %v670
        %v707 = vmul.f32 %v546, %v675
        %v708 = vmul.f32 %v595, %v675
        %710 = vset.pattern.permute.xlu0 0
        %711 = vperm.xlu0 %710, %v393
        %v712 = vpop.permute.xlu0 %711
        %715 = vset.pattern.permute.xlu0 0
        %716 = vperm.xlu0 %715, %v394
        %v717 = vpop.permute.xlu0 %716
        %720 = vset.pattern.permute.xlu0 0
        %721 = vperm.xlu0 %720, %v395
        %v722 = vpop.permute.xlu0 %721
        %725 = vset.pattern.permute.xlu0 0
        %726 = vperm.xlu0 %725, %v396
        %v727 = vpop.permute.xlu0 %726
        %730 = vset.pattern.permute.xlu0 0
        %731 = vperm.xlu0 %730, %v397
        %v732 = vpop.permute.xlu0 %731
        %735 = vset.pattern.permute.xlu0 0
        %736 = vperm.xlu0 %735, %v398
        %v737 = vpop.permute.xlu0 %736
        %740 = vset.pattern.permute.xlu0 0
        %741 = vperm.xlu0 %740, %v399
        %v742 = vpop.permute.xlu0 %741
        %745 = vset.pattern.permute.xlu0 0
        %746 = vperm.xlu0 %745, %v400
        %v747 = vpop.permute.xlu0 %746
        %750 = vset.pattern.permute.xlu0 0
        %751 = vperm.xlu0 %750, %v401
        %v752 = vpop.permute.xlu0 %751
        %755 = vset.pattern.permute.xlu0 0
        %756 = vperm.xlu0 %755, %v402
        %v757 = vpop.permute.xlu0 %756
        %760 = vset.pattern.permute.xlu0 0
        %761 = vperm.xlu0 %760, %v403
        %v762 = vpop.permute.xlu0 %761
        %765 = vset.pattern.permute.xlu0 0
        %766 = vperm.xlu0 %765, %v404
        %v767 = vpop.permute.xlu0 %766
        %770 = vset.pattern.permute.xlu0 0
        %771 = vperm.xlu0 %770, %v405
        %v772 = vpop.permute.xlu0 %771
        %775 = vset.pattern.permute.xlu0 0
        %776 = vperm.xlu0 %775, %v406
        %v777 = vpop.permute.xlu0 %776
        %780 = vset.pattern.permute.xlu0 0
        %781 = vperm.xlu0 %780, %v407
        %v782 = vpop.permute.xlu0 %781
        %785 = vset.pattern.permute.xlu0 0
        %786 = vperm.xlu0 %785, %v408
        %v787 = vpop.permute.xlu0 %786
        %v789 = vadd.f32 %v677, %v712
        %v790 = vadd.f32 %v678, %v712
        %v791 = vadd.f32 %v679, %v717
        %v792 = vadd.f32 %v680, %v717
        %v793 = vadd.f32 %v681, %v722
        %v794 = vadd.f32 %v682, %v722
        %v795 = vadd.f32 %v683, %v727
        %v796 = vadd.f32 %v684, %v727
        %v797 = vadd.f32 %v685, %v732
        %v798 = vadd.f32 %v686, %v732
        %v799 = vadd.f32 %v687, %v737
        %v800 = vadd.f32 %v688, %v737
        %v801 = vadd.f32 %v689, %v742
        %v802 = vadd.f32 %v690, %v742
        %v803 = vadd.f32 %v691, %v747
        %v804 = vadd.f32 %v692, %v747
        %v805 = vadd.f32 %v693, %v752
        %v806 = vadd.f32 %v694, %v752
        %v807 = vadd.f32 %v695, %v757
        %v808 = vadd.f32 %v696, %v757
        %v809 = vadd.f32 %v697, %v762
        %v810 = vadd.f32 %v698, %v762
        %v811 = vadd.f32 %v699, %v767
        %v812 = vadd.f32 %v700, %v767
        %v813 = vadd.f32 %v701, %v772
        %v814 = vadd.f32 %v702, %v772
        %v815 = vadd.f32 %v703, %v777
        %v816 = vadd.f32 %v704, %v777
        %v817 = vadd.f32 %v705, %v782
        %v818 = vadd.f32 %v706, %v782
        %v819 = vadd.f32 %v707, %v787
        %v820 = vadd.f32 %v708, %v787
        %v821 = vmul.f32 %v789, %v789
        %v822 = vmul.f32 %v790, %v790
        %v823 = vmul.f32 %v791, %v791
        %v824 = vmul.f32 %v792, %v792
        %v825 = vmul.f32 %v793, %v793
        %v826 = vmul.f32 %v794, %v794
        %v827 = vmul.f32 %v795, %v795
        %v828 = vmul.f32 %v796, %v796
        %v829 = vmul.f32 %v797, %v797
        %v830 = vmul.f32 %v798, %v798
        %v831 = vmul.f32 %v799, %v799
        %v832 = vmul.f32 %v800, %v800
        %v833 = vmul.f32 %v801, %v801
        %v834 = vmul.f32 %v802, %v802
        %v835 = vmul.f32 %v803, %v803
        %v836 = vmul.f32 %v804, %v804
        %v837 = vmul.f32 %v805, %v805
        %v838 = vmul.f32 %v806, %v806
        %v839 = vmul.f32 %v807, %v807
        %v840 = vmul.f32 %v808, %v808
        %v841 = vmul.f32 %v809, %v809
        %v842 = vmul.f32 %v810, %v810
        %v843 = vmul.f32 %v811, %v811
        %v844 = vmul.f32 %v812, %v812
        %v845 = vmul.f32 %v813, %v813
        %v846 = vmul.f32 %v814, %v814
        %v847 = vmul.f32 %v815, %v815
        %v848 = vmul.f32 %v816, %v816
        %v849 = vmul.f32 %v817, %v817
        %v850 = vmul.f32 %v818, %v818
        %v851 = vmul.f32 %v819, %v819
        %v852 = vmul.f32 %v820, %v820
        %v853 = vmul.f32 %v789, %v821
        %v854 = vmul.f32 %v790, %v822
        %v855 = vmul.f32 %v791, %v823
        %v856 = vmul.f32 %v792, %v824
        %v857 = vmul.f32 %v793, %v825
        %v858 = vmul.f32 %v794, %v826
        %v859 = vmul.f32 %v795, %v827
        %v860 = vmul.f32 %v796, %v828
        %v861 = vmul.f32 %v797, %v829
        %v862 = vmul.f32 %v798, %v830
        %v863 = vmul.f32 %v799, %v831
        %v864 = vmul.f32 %v800, %v832
        %v865 = vmul.f32 %v801, %v833
        %v866 = vmul.f32 %v802, %v834
        %v867 = vmul.f32 %v803, %v835
        %v868 = vmul.f32 %v804, %v836
        %v869 = vmul.f32 %v805, %v837
        %v870 = vmul.f32 %v806, %v838
        %v871 = vmul.f32 %v807, %v839
        %v872 = vmul.f32 %v808, %v840
        %v873 = vmul.f32 %v809, %v841
        %v874 = vmul.f32 %v810, %v842
        %v875 = vmul.f32 %v811, %v843
        %v876 = vmul.f32 %v812, %v844
        %v877 = vmul.f32 %v813, %v845
        %v878 = vmul.f32 %v814, %v846
        %v879 = vmul.f32 %v815, %v847
        %v880 = vmul.f32 %v816, %v848
        %v881 = vmul.f32 %v817, %v849
        %v882 = vmul.f32 %v818, %v850
        %v883 = vmul.f32 %v819, %v851
        %v884 = vmul.f32 %v820, %v852
        %v885 = vmul.f32 %v853, 0.044715
        %v886 = vmul.f32 %v854, 0.044715
        %v887 = vmul.f32 %v855, 0.044715
        %v888 = vmul.f32 %v856, 0.044715
        %v889 = vmul.f32 %v857, 0.044715
        %v890 = vmul.f32 %v858, 0.044715
        %v891 = vmul.f32 %v859, 0.044715
        %v892 = vmul.f32 %v860, 0.044715
        %v893 = vmul.f32 %v861, 0.044715
        %v894 = vmul.f32 %v862, 0.044715
        %v895 = vmul.f32 %v863, 0.044715
        %v896 = vmul.f32 %v864, 0.044715
        %v897 = vmul.f32 %v865, 0.044715
        %v898 = vmul.f32 %v866, 0.044715
        %v899 = vmul.f32 %v867, 0.044715
        %v900 = vmul.f32 %v868, 0.044715
        %v901 = vmul.f32 %v869, 0.044715
        %v902 = vmul.f32 %v870, 0.044715
        %v903 = vmul.f32 %v871, 0.044715
        %v904 = vmul.f32 %v872, 0.044715
        %v905 = vmul.f32 %v873, 0.044715
        %v906 = vmul.f32 %v874, 0.044715
        %v907 = vmul.f32 %v875, 0.044715
        %v908 = vmul.f32 %v876, 0.044715
        %v909 = vmul.f32 %v877, 0.044715
        %v910 = vmul.f32 %v878, 0.044715
        %v911 = vmul.f32 %v879, 0.044715
        %v912 = vmul.f32 %v880, 0.044715
        %v913 = vmul.f32 %v881, 0.044715
        %v914 = vmul.f32 %v882, 0.044715
        %v915 = vmul.f32 %v883, 0.044715
        %v916 = vmul.f32 %v884, 0.044715
        %v917 = vadd.f32 %v789, %v885
        %v918 = vadd.f32 %v790, %v886
        %v919 = vadd.f32 %v791, %v887
        %v920 = vadd.f32 %v792, %v888
        %v921 = vadd.f32 %v793, %v889
        %v922 = vadd.f32 %v794, %v890
        %v923 = vadd.f32 %v795, %v891
        %v924 = vadd.f32 %v796, %v892
        %v925 = vadd.f32 %v797, %v893
        %v926 = vadd.f32 %v798, %v894
        %v927 = vadd.f32 %v799, %v895
        %v928 = vadd.f32 %v800, %v896
        %v929 = vadd.f32 %v801, %v897
        %v930 = vadd.f32 %v802, %v898
        %v931 = vadd.f32 %v803, %v899
        %v932 = vadd.f32 %v804, %v900
        %v933 = vadd.f32 %v805, %v901
        %v934 = vadd.f32 %v806, %v902
        %v935 = vadd.f32 %v807, %v903
        %v936 = vadd.f32 %v808, %v904
        %v937 = vadd.f32 %v809, %v905
        %v938 = vadd.f32 %v810, %v906
        %v939 = vadd.f32 %v811, %v907
        %v940 = vadd.f32 %v812, %v908
        %v941 = vadd.f32 %v813, %v909
        %v942 = vadd.f32 %v814, %v910
        %v943 = vadd.f32 %v815, %v911
        %v944 = vadd.f32 %v816, %v912
        %v945 = vadd.f32 %v817, %v913
        %v946 = vadd.f32 %v818, %v914
        %v947 = vadd.f32 %v819, %v915
        %v948 = vadd.f32 %v820, %v916
        %v949 = vmul.f32 %v917, 0.7978846
        %v950 = vmul.f32 %v918, 0.7978846
        %v951 = vmul.f32 %v919, 0.7978846
        %v952 = vmul.f32 %v920, 0.7978846
        %v953 = vmul.f32 %v921, 0.7978846
        %v954 = vmul.f32 %v922, 0.7978846
        %v955 = vmul.f32 %v923, 0.7978846
        %v956 = vmul.f32 %v924, 0.7978846
        %v957 = vmul.f32 %v925, 0.7978846
        %v958 = vmul.f32 %v926, 0.7978846
        %v959 = vmul.f32 %v927, 0.7978846
        %v960 = vmul.f32 %v928, 0.7978846
        %v961 = vmul.f32 %v929, 0.7978846
        %v962 = vmul.f32 %v930, 0.7978846
        %v963 = vmul.f32 %v931, 0.7978846
        %v964 = vmul.f32 %v932, 0.7978846
        %v965 = vmul.f32 %v933, 0.7978846
        %v966 = vmul.f32 %v934, 0.7978846
        %v967 = vmul.f32 %v935, 0.7978846
        %v968 = vmul.f32 %v936, 0.7978846
        %v969 = vmul.f32 %v937, 0.7978846
        %v970 = vmul.f32 %v938, 0.7978846
        %v971 = vmul.f32 %v939, 0.7978846
        %v972 = vmul.f32 %v940, 0.7978846
        %v973 = vmul.f32 %v941, 0.7978846
        %v974 = vmul.f32 %v942, 0.7978846
        %v975 = vmul.f32 %v943, 0.7978846
        %v976 = vmul.f32 %v944, 0.7978846
        %v977 = vmul.f32 %v945, 0.7978846
        %v978 = vmul.f32 %v946, 0.7978846
        %v979 = vmul.f32 %v947, 0.7978846
        %v980 = vmul.f32 %v948, 0.7978846
        %v981 = vtanh.pop %v949
        %v982 = vtanh.pop %v950
        %v983 = vtanh.pop %v951
        %v984 = vtanh.pop %v952
        %v985 = vtanh.pop %v953
        %v986 = vtanh.pop %v954
        %v987 = vtanh.pop %v955
        %v988 = vtanh.pop %v956
        %v989 = vtanh.pop %v957
        %v990 = vtanh.pop %v958
        %v991 = vtanh.pop %v959
        %v992 = vtanh.pop %v960
        %v993 = vtanh.pop %v961
        %v994 = vtanh.pop %v962
        %v995 = vtanh.pop %v963
        %v996 = vtanh.pop %v964
        %v997 = vtanh.pop %v965
        %v998 = vtanh.pop %v966
        %v999 = vtanh.pop %v967
        %v1000 = vtanh.pop %v968
        %v1001 = vtanh.pop %v969
        %v1002 = vtanh.pop %v970
        %v1003 = vtanh.pop %v971
        %v1004 = vtanh.pop %v972
        %v1005 = vtanh.pop %v973
        %v1006 = vtanh.pop %v974
        %v1007 = vtanh.pop %v975
        %v1008 = vtanh.pop %v976
        %v1009 = vtanh.pop %v977
        %v1010 = vtanh.pop %v978
        %v1011 = vtanh.pop %v979
        %v1012 = vtanh.pop %v980
        %v1013 = vadd.f32 %v981, 1.0
        %v1014 = vadd.f32 %v982, 1.0
        %v1015 = vadd.f32 %v983, 1.0
        %v1016 = vadd.f32 %v984, 1.0
        %v1017 = vadd.f32 %v985, 1.0
        %v1018 = vadd.f32 %v986, 1.0
        %v1019 = vadd.f32 %v987, 1.0
        %v1020 = vadd.f32 %v988, 1.0
        %v1021 = vadd.f32 %v989, 1.0
        %v1022 = vadd.f32 %v990, 1.0
        %v1023 = vadd.f32 %v991, 1.0
        %v1024 = vadd.f32 %v992, 1.0
        %v1025 = vadd.f32 %v993, 1.0
        %v1026 = vadd.f32 %v994, 1.0
        %v1027 = vadd.f32 %v995, 1.0
        %v1028 = vadd.f32 %v996, 1.0
        %v1029 = vadd.f32 %v997, 1.0
        %v1030 = vadd.f32 %v998, 1.0
        %v1031 = vadd.f32 %v999, 1.0
        %v1032 = vadd.f32 %v1000, 1.0
        %v1033 = vadd.f32 %v1001, 1.0
        %v1034 = vadd.f32 %v1002, 1.0
        %v1035 = vadd.f32 %v1003, 1.0
        %v1036 = vadd.f32 %v1004, 1.0
        %v1037 = vadd.f32 %v1005, 1.0
        %v1038 = vadd.f32 %v1006, 1.0
        %v1039 = vadd.f32 %v1007, 1.0
        %v1040 = vadd.f32 %v1008, 1.0
        %v1041 = vadd.f32 %v1009, 1.0
        %v1042 = vadd.f32 %v1010, 1.0
        %v1043 = vadd.f32 %v1011, 1.0
        %v1044 = vadd.f32 %v1012, 1.0
        %v1045 = vmul.f32 %v1013, 0.5
        %v1046 = vmul.f32 %v1014, 0.5
        %v1047 = vmul.f32 %v1015, 0.5
        %v1048 = vmul.f32 %v1016, 0.5
        %v1049 = vmul.f32 %v1017, 0.5
        %v1050 = vmul.f32 %v1018, 0.5
        %v1051 = vmul.f32 %v1019, 0.5
        %v1052 = vmul.f32 %v1020, 0.5
        %v1053 = vmul.f32 %v1021, 0.5
        %v1054 = vmul.f32 %v1022, 0.5
        %v1055 = vmul.f32 %v1023, 0.5
        %v1056 = vmul.f32 %v1024, 0.5
        %v1057 = vmul.f32 %v1025, 0.5
        %v1058 = vmul.f32 %v1026, 0.5
        %v1059 = vmul.f32 %v1027, 0.5
        %v1060 = vmul.f32 %v1028, 0.5
        %v1061 = vmul.f32 %v1029, 0.5
        %v1062 = vmul.f32 %v1030, 0.5
        %v1063 = vmul.f32 %v1031, 0.5
        %v1064 = vmul.f32 %v1032, 0.5
        %v1065 = vmul.f32 %v1033, 0.5
        %v1066 = vmul.f32 %v1034, 0.5
        %v1067 = vmul.f32 %v1035, 0.5
        %v1068 = vmul.f32 %v1036, 0.5
        %v1069 = vmul.f32 %v1037, 0.5
        %v1070 = vmul.f32 %v1038, 0.5
        %v1071 = vmul.f32 %v1039, 0.5
        %v1072 = vmul.f32 %v1040, 0.5
        %v1073 = vmul.f32 %v1041, 0.5
        %v1074 = vmul.f32 %v1042, 0.5
        %v1075 = vmul.f32 %v1043, 0.5
        %v1076 = vmul.f32 %v1044, 0.5
        %v1077 = vmul.f32 %v789, %v1045
        %v1078 = vmul.f32 %v790, %v1046
        %v1079 = vmul.f32 %v791, %v1047
        %v1080 = vmul.f32 %v792, %v1048
        %v1081 = vmul.f32 %v793, %v1049
        %v1082 = vmul.f32 %v794, %v1050
        %v1083 = vmul.f32 %v795, %v1051
        %v1084 = vmul.f32 %v796, %v1052
        %v1085 = vmul.f32 %v797, %v1053
        %v1086 = vmul.f32 %v798, %v1054
        %v1087 = vmul.f32 %v799, %v1055
        %v1088 = vmul.f32 %v800, %v1056
        %v1089 = vmul.f32 %v801, %v1057
        %v1090 = vmul.f32 %v802, %v1058
        %v1091 = vmul.f32 %v803, %v1059
        %v1092 = vmul.f32 %v804, %v1060
        %v1093 = vmul.f32 %v805, %v1061
        %v1094 = vmul.f32 %v806, %v1062
        %v1095 = vmul.f32 %v807, %v1063
        %v1096 = vmul.f32 %v808, %v1064
        %v1097 = vmul.f32 %v809, %v1065
        %v1098 = vmul.f32 %v810, %v1066
        %v1099 = vmul.f32 %v811, %v1067
        %v1100 = vmul.f32 %v812, %v1068
        %v1101 = vmul.f32 %v813, %v1069
        %v1102 = vmul.f32 %v814, %v1070
        %v1103 = vmul.f32 %v815, %v1071
        %v1104 = vmul.f32 %v816, %v1072
        %v1105 = vmul.f32 %v817, %v1073
        %v1106 = vmul.f32 %v818, %v1074
        %v1107 = vmul.f32 %v819, %v1075
        %v1108 = vmul.f32 %v820, %v1076
        %v1109 = vpack.c.bf16 %v1079, %v1077
        %v1110 = vpack.c.bf16 %v1080, %v1078
        %v1111 = vpack.c.bf16 %v1083, %v1081
        %v1112 = vpack.c.bf16 %v1084, %v1082
        %v1113 = vpack.c.bf16 %v1087, %v1085
        %v1114 = vpack.c.bf16 %v1088, %v1086
        %v1115 = vpack.c.bf16 %v1091, %v1089
        %v1116 = vpack.c.bf16 %v1092, %v1090
        %v1117 = vpack.c.bf16 %v1095, %v1093
        %v1118 = vpack.c.bf16 %v1096, %v1094
        %v1119 = vpack.c.bf16 %v1099, %v1097
        %v1120 = vpack.c.bf16 %v1100, %v1098
        %v1121 = vpack.c.bf16 %v1103, %v1101
        %v1122 = vpack.c.bf16 %v1104, %v1102
        %v1123 = vpack.c.bf16 %v1107, %v1105
        %v1124 = vpack.c.bf16 %v1108, %v1106
        %v1125 = vld [vmem:[%s4] sm:$0xf]
        %v1126 = vld [vmem:[%s4 + $0x4] sm:$0xf]
        %v1127 = vld [vmem:[%s4 + $0x8] sm:$0xf]
        %v1128 = vld [vmem:[%s4 + $0xc] sm:$0xf]
        %v1129 = vld [vmem:[%s4 + $0x10] sm:$0xf]
        %v1130 = vld [vmem:[%s4 + $0x14] sm:$0xf]
        %v1131 = vld [vmem:[%s4 + $0x18] sm:$0xf]
        %v1132 = vld [vmem:[%s4 + $0x1c] sm:$0xf]
        %v1133 = vld [vmem:[%s4 + $0x20] sm:$0xf]
        %v1134 = vld [vmem:[%s4 + $0x24] sm:$0xf]
        %v1135 = vld [vmem:[%s4 + $0x28] sm:$0xf]
        %v1136 = vld [vmem:[%s4 + $0x2c] sm:$0xf]
        %v1137 = vld [vmem:[%s4 + $0x30] sm:$0xf]
        %v1138 = vld [vmem:[%s4 + $0x34] sm:$0xf]
        %v1139 = vld [vmem:[%s4 + $0x38] sm:$0xf]
        %v1140 = vld [vmem:[%s4 + $0x3c] sm:$0xf]
        %v1157 = vunpack.c.l.b16 %v1125
        %v1158 = vunpack.c.l.b16 %v1126
        %v1159 = vunpack.c.l.b16 %v1127
        %v1160 = vunpack.c.l.b16 %v1128
        %v1161 = vunpack.c.l.b16 %v1129
        %v1162 = vunpack.c.l.b16 %v1130
        %v1163 = vunpack.c.l.b16 %v1131
        %v1164 = vunpack.c.l.b16 %v1132
        %v1165 = vunpack.c.l.b16 %v1133
        %v1166 = vunpack.c.l.b16 %v1134
        %v1167 = vunpack.c.l.b16 %v1135
        %v1168 = vunpack.c.l.b16 %v1136
        %v1169 = vunpack.c.l.b16 %v1137
        %v1170 = vunpack.c.l.b16 %v1138
        %v1171 = vunpack.c.l.b16 %v1139
        %v1172 = vunpack.c.l.b16 %v1140
        %v1173 = vpack.c.b16 %v1158, %v1157
        %v1174 = vpack.c.b16 %v1160, %v1159
        %v1175 = vpack.c.b16 %v1162, %v1161
        %v1176 = vpack.c.b16 %v1164, %v1163
        %v1177 = vpack.c.b16 %v1166, %v1165
        %v1178 = vpack.c.b16 %v1168, %v1167
        %v1179 = vpack.c.b16 %v1170, %v1169
        %v1180 = vpack.c.b16 %v1172, %v1171
        %1189 = vmatpush.bf16.msra.mxu0 %v1123
        %1190 = vmatpush.bf16.msra.mxu0 %v1121
        %1191 = vmatpush.bf16.msra.mxu0 %v1119
        %1192 = vmatpush.bf16.msra.mxu0 %v1117
        %1193 = vmatpush.bf16.msra.mxu0 %v1115
        %1194 = vmatpush.bf16.msra.mxu0 %v1113
        %1195 = vmatpush.bf16.msra.mxu0 %v1111
        %1196 = vmatpush.bf16.msra.mxu0 %v1109
        %1197 = vmatmul.bf16.gmra.mxu0 %v1173
        %v1198 = vpop.f32.mrf.mxu0
        %v1199 = vadd.f32 0.0, %v1198
        %v1200 = vpop.f32.mrf.mxu0
        %v1201 = vadd.f32 0.0, %v1200
        %1202 = vmatmul.bf16.gmra.mxu0 %v1174
        %v1203 = vpop.f32.mrf.mxu0
        %v1204 = vadd.f32 0.0, %v1203
        %v1205 = vpop.f32.mrf.mxu0
        %v1206 = vadd.f32 0.0, %v1205
        %1207 = vmatmul.bf16.gmra.mxu0 %v1175
        %v1208 = vpop.f32.mrf.mxu0
        %v1209 = vadd.f32 0.0, %v1208
        %v1210 = vpop.f32.mrf.mxu0
        %v1211 = vadd.f32 0.0, %v1210
        %1212 = vmatmul.bf16.gmra.mxu0 %v1176
        %v1213 = vpop.f32.mrf.mxu0
        %v1214 = vadd.f32 0.0, %v1213
        %v1215 = vpop.f32.mrf.mxu0
        %v1216 = vadd.f32 0.0, %v1215
        %1217 = vmatmul.bf16.gmra.mxu0 %v1177
        %v1218 = vpop.f32.mrf.mxu0
        %v1219 = vadd.f32 0.0, %v1218
        %v1220 = vpop.f32.mrf.mxu0
        %v1221 = vadd.f32 0.0, %v1220
        %1222 = vmatmul.bf16.gmra.mxu0 %v1178
        %v1223 = vpop.f32.mrf.mxu0
        %v1224 = vadd.f32 0.0, %v1223
        %v1225 = vpop.f32.mrf.mxu0
        %v1226 = vadd.f32 0.0, %v1225
        %1227 = vmatmul.bf16.gmra.mxu0 %v1179
        %v1228 = vpop.f32.mrf.mxu0
        %v1229 = vadd.f32 0.0, %v1228
        %v1230 = vpop.f32.mrf.mxu0
        %v1231 = vadd.f32 0.0, %v1230
        %1232 = vmatmul.bf16.gmra.mxu0 %v1180
        %v1233 = vpop.f32.mrf.mxu0
        %v1234 = vadd.f32 0.0, %v1233
        %v1235 = vpop.f32.mrf.mxu0
        %v1236 = vadd.f32 0.0, %v1235
        %1237 = vdwg.mxu0
        %1238 = vmatpush.bf16.msra.mxu0 %v1124
        %1239 = vmatpush.bf16.msra.mxu0 %v1122
        %1240 = vmatpush.bf16.msra.mxu0 %v1120
        %1241 = vmatpush.bf16.msra.mxu0 %v1118
        %1242 = vmatpush.bf16.msra.mxu0 %v1116
        %1243 = vmatpush.bf16.msra.mxu0 %v1114
        %1244 = vmatpush.bf16.msra.mxu0 %v1112
        %1245 = vmatpush.bf16.msra.mxu0 %v1110
        %1246 = vmatmul.bf16.gmra.mxu0 %v1173
        %v1247 = vpop.f32.mrf.mxu0
        %v1248 = vadd.f32 0.0, %v1247
        %v1249 = vpop.f32.mrf.mxu0
        %v1250 = vadd.f32 0.0, %v1249
        %1251 = vmatmul.bf16.gmra.mxu0 %v1174
        %v1252 = vpop.f32.mrf.mxu0
        %v1253 = vadd.f32 0.0, %v1252
        %v1254 = vpop.f32.mrf.mxu0
        %v1255 = vadd.f32 0.0, %v1254
        %1256 = vmatmul.bf16.gmra.mxu0 %v1175
        %v1257 = vpop.f32.mrf.mxu0
        %v1258 = vadd.f32 0.0, %v1257
        %v1259 = vpop.f32.mrf.mxu0
        %v1260 = vadd.f32 0.0, %v1259
        %1261 = vmatmul.bf16.gmra.mxu0 %v1176
        %v1262 = vpop.f32.mrf.mxu0
        %v1263 = vadd.f32 0.0, %v1262
        %v1264 = vpop.f32.mrf.mxu0
        %v1265 = vadd.f32 0.0, %v1264
        %1266 = vmatmul.bf16.gmra.mxu0 %v1177
        %v1267 = vpop.f32.mrf.mxu0
        %v1268 = vadd.f32 0.0, %v1267
        %v1269 = vpop.f32.mrf.mxu0
        %v1270 = vadd.f32 0.0, %v1269
        %1271 = vmatmul.bf16.gmra.mxu0 %v1178
        %v1272 = vpop.f32.mrf.mxu0
        %v1273 = vadd.f32 0.0, %v1272
        %v1274 = vpop.f32.mrf.mxu0
        %v1275 = vadd.f32 0.0, %v1274
        %1276 = vmatmul.bf16.gmra.mxu0 %v1179
        %v1277 = vpop.f32.mrf.mxu0
        %v1278 = vadd.f32 0.0, %v1277
        %v1279 = vpop.f32.mrf.mxu0
        %v1280 = vadd.f32 0.0, %v1279
        %1281 = vmatmul.bf16.gmra.mxu0 %v1180
        %v1282 = vpop.f32.mrf.mxu0
        %v1283 = vadd.f32 0.0, %v1282
        %v1284 = vpop.f32.mrf.mxu0
        %v1285 = vadd.f32 0.0, %v1284
        %1286 = vdwg.mxu0
        %v1287 = vadd.f32 %v789, %v1199
        %v1288 = vadd.f32 %v790, %v1248
        %v1289 = vadd.f32 %v791, %v1201
        %v1290 = vadd.f32 %v792, %v1250
        %v1291 = vadd.f32 %v793, %v1204
        %v1292 = vadd.f32 %v794, %v1253
        %v1293 = vadd.f32 %v795, %v1206
        %v1294 = vadd.f32 %v796, %v1255
        %v1295 = vadd.f32 %v797, %v1209
        %v1296 = vadd.f32 %v798, %v1258
        %v1297 = vadd.f32 %v799, %v1211
        %v1298 = vadd.f32 %v800, %v1260
        %v1299 = vadd.f32 %v801, %v1214
        %v1300 = vadd.f32 %v802, %v1263
        %v1301 = vadd.f32 %v803, %v1216
        %v1302 = vadd.f32 %v804, %v1265
        %v1303 = vadd.f32 %v805, %v1219
        %v1304 = vadd.f32 %v806, %v1268
        %v1305 = vadd.f32 %v807, %v1221
        %v1306 = vadd.f32 %v808, %v1270
        %v1307 = vadd.f32 %v809, %v1224
        %v1308 = vadd.f32 %v810, %v1273
        %v1309 = vadd.f32 %v811, %v1226
        %v1310 = vadd.f32 %v812, %v1275
        %v1311 = vadd.f32 %v813, %v1229
        %v1312 = vadd.f32 %v814, %v1278
        %v1313 = vadd.f32 %v815, %v1231
        %v1314 = vadd.f32 %v816, %v1280
        %v1315 = vadd.f32 %v817, %v1234
        %v1316 = vadd.f32 %v818, %v1283
        %v1317 = vadd.f32 %v819, %v1236
        %v1318 = vadd.f32 %v820, %v1285
        %v1319 = vld [vmem:[%s6] sm:$0xff]
        %v1320 = vld [vmem:[%s6 + $0x8] sm:$0xff]
        %v1321 = vld [vmem:[%s6 + $0x10] sm:$0xff]
        %v1322 = vld [vmem:[%s6 + $0x18] sm:$0xff]
        %v1323 = vld [vmem:[%s6 + $0x20] sm:$0xff]
        %v1324 = vld [vmem:[%s6 + $0x28] sm:$0xff]
        %v1325 = vld [vmem:[%s6 + $0x30] sm:$0xff]
        %v1326 = vld [vmem:[%s6 + $0x38] sm:$0xff]
        %v1327 = vld [vmem:[%s6 + $0x40] sm:$0xff]
        %v1328 = vld [vmem:[%s6 + $0x48] sm:$0xff]
        %v1329 = vld [vmem:[%s6 + $0x50] sm:$0xff]
        %v1330 = vld [vmem:[%s6 + $0x58] sm:$0xff]
        %v1331 = vld [vmem:[%s6 + $0x60] sm:$0xff]
        %v1332 = vld [vmem:[%s6 + $0x68] sm:$0xff]
        %v1333 = vld [vmem:[%s6 + $0x70] sm:$0xff]
        %v1334 = vld [vmem:[%s6 + $0x78] sm:$0xff]
        %1336 = vset.pattern.permute.xlu0 0
        %1337 = vperm.xlu0 %1336, %v1319
        %v1338 = vpop.permute.xlu0 %1337
        %1341 = vset.pattern.permute.xlu0 0
        %1342 = vperm.xlu0 %1341, %v1320
        %v1343 = vpop.permute.xlu0 %1342
        %1346 = vset.pattern.permute.xlu0 0
        %1347 = vperm.xlu0 %1346, %v1321
        %v1348 = vpop.permute.xlu0 %1347
        %1351 = vset.pattern.permute.xlu0 0
        %1352 = vperm.xlu0 %1351, %v1322
        %v1353 = vpop.permute.xlu0 %1352
        %1356 = vset.pattern.permute.xlu0 0
        %1357 = vperm.xlu0 %1356, %v1323
        %v1358 = vpop.permute.xlu0 %1357
        %1361 = vset.pattern.permute.xlu0 0
        %1362 = vperm.xlu0 %1361, %v1324
        %v1363 = vpop.permute.xlu0 %1362
        %1366 = vset.pattern.permute.xlu0 0
        %1367 = vperm.xlu0 %1366, %v1325
        %v1368 = vpop.permute.xlu0 %1367
        %1371 = vset.pattern.permute.xlu0 0
        %1372 = vperm.xlu0 %1371, %v1326
        %v1373 = vpop.permute.xlu0 %1372
        %1376 = vset.pattern.permute.xlu0 0
        %1377 = vperm.xlu0 %1376, %v1327
        %v1378 = vpop.permute.xlu0 %1377
        %1381 = vset.pattern.permute.xlu0 0
        %1382 = vperm.xlu0 %1381, %v1328
        %v1383 = vpop.permute.xlu0 %1382
        %1386 = vset.pattern.permute.xlu0 0
        %1387 = vperm.xlu0 %1386, %v1329
        %v1388 = vpop.permute.xlu0 %1387
        %1391 = vset.pattern.permute.xlu0 0
        %1392 = vperm.xlu0 %1391, %v1330
        %v1393 = vpop.permute.xlu0 %1392
        %1396 = vset.pattern.permute.xlu0 0
        %1397 = vperm.xlu0 %1396, %v1331
        %v1398 = vpop.permute.xlu0 %1397
        %1401 = vset.pattern.permute.xlu0 0
        %1402 = vperm.xlu0 %1401, %v1332
        %v1403 = vpop.permute.xlu0 %1402
        %1406 = vset.pattern.permute.xlu0 0
        %1407 = vperm.xlu0 %1406, %v1333
        %v1408 = vpop.permute.xlu0 %1407
        %1411 = vset.pattern.permute.xlu0 0
        %1412 = vperm.xlu0 %1411, %v1334
        %v1413 = vpop.permute.xlu0 %1412
        %v1415 = vadd.f32 %v1287, %v1338
        %v1416 = vadd.f32 %v1288, %v1338
        %v1417 = vadd.f32 %v1289, %v1343
        %v1418 = vadd.f32 %v1290, %v1343
        %v1419 = vadd.f32 %v1291, %v1348
        %v1420 = vadd.f32 %v1292, %v1348
        %v1421 = vadd.f32 %v1293, %v1353
        %v1422 = vadd.f32 %v1294, %v1353
        %v1423 = vadd.f32 %v1295, %v1358
        %v1424 = vadd.f32 %v1296, %v1358
        %v1425 = vadd.f32 %v1297, %v1363
        %v1426 = vadd.f32 %v1298, %v1363
        %v1427 = vadd.f32 %v1299, %v1368
        %v1428 = vadd.f32 %v1300, %v1368
        %v1429 = vadd.f32 %v1301, %v1373
        %v1430 = vadd.f32 %v1302, %v1373
        %v1431 = vadd.f32 %v1303, %v1378
        %v1432 = vadd.f32 %v1304, %v1378
        %v1433 = vadd.f32 %v1305, %v1383
        %v1434 = vadd.f32 %v1306, %v1383
        %v1435 = vadd.f32 %v1307, %v1388
        %v1436 = vadd.f32 %v1308, %v1388
        %v1437 = vadd.f32 %v1309, %v1393
        %v1438 = vadd.f32 %v1310, %v1393
        %v1439 = vadd.f32 %v1311, %v1398
        %v1440 = vadd.f32 %v1312, %v1398
        %v1441 = vadd.f32 %v1313, %v1403
        %v1442 = vadd.f32 %v1314, %v1403
        %v1443 = vadd.f32 %v1315, %v1408
        %v1444 = vadd.f32 %v1316, %v1408
        %v1445 = vadd.f32 %v1317, %v1413
        %v1446 = vadd.f32 %v1318, %v1413
        %v1447 = vmul.f32 %v1415, %v1415
        %v1448 = vmul.f32 %v1416, %v1416
        %v1449 = vmul.f32 %v1417, %v1417
        %v1450 = vmul.f32 %v1418, %v1418
        %v1451 = vmul.f32 %v1419, %v1419
        %v1452 = vmul.f32 %v1420, %v1420
        %v1453 = vmul.f32 %v1421, %v1421
        %v1454 = vmul.f32 %v1422, %v1422
        %v1455 = vmul.f32 %v1423, %v1423
        %v1456 = vmul.f32 %v1424, %v1424
        %v1457 = vmul.f32 %v1425, %v1425
        %v1458 = vmul.f32 %v1426, %v1426
        %v1459 = vmul.f32 %v1427, %v1427
        %v1460 = vmul.f32 %v1428, %v1428
        %v1461 = vmul.f32 %v1429, %v1429
        %v1462 = vmul.f32 %v1430, %v1430
        %v1463 = vmul.f32 %v1431, %v1431
        %v1464 = vmul.f32 %v1432, %v1432
        %v1465 = vmul.f32 %v1433, %v1433
        %v1466 = vmul.f32 %v1434, %v1434
        %v1467 = vmul.f32 %v1435, %v1435
        %v1468 = vmul.f32 %v1436, %v1436
        %v1469 = vmul.f32 %v1437, %v1437
        %v1470 = vmul.f32 %v1438, %v1438
        %v1471 = vmul.f32 %v1439, %v1439
        %v1472 = vmul.f32 %v1440, %v1440
        %v1473 = vmul.f32 %v1441, %v1441
        %v1474 = vmul.f32 %v1442, %v1442
        %v1475 = vmul.f32 %v1443, %v1443
        %v1476 = vmul.f32 %v1444, %v1444
        %v1477 = vmul.f32 %v1445, %v1445
        %v1478 = vmul.f32 %v1446, %v1446
        %v1479 = vmul.f32 %v1415, %v1447
        %v1480 = vmul.f32 %v1416, %v1448
        %v1481 = vmul.f32 %v1417, %v1449
        %v1482 = vmul.f32 %v1418, %v1450
        %v1483 = vmul.f32 %v1419, %v1451
        %v1484 = vmul.f32 %v1420, %v1452
        %v1485 = vmul.f32 %v1421, %v1453
        %v1486 = vmul.f32 %v1422, %v1454
        %v1487 = vmul.f32 %v1423, %v1455
        %v1488 = vmul.f32 %v1424, %v1456
        %v1489 = vmul.f32 %v1425, %v1457
        %v1490 = vmul.f32 %v1426, %v1458
        %v1491 = vmul.f32 %v1427, %v1459
        %v1492 = vmul.f32 %v1428, %v1460
        %v1493 = vmul.f32 %v1429, %v1461
        %v1494 = vmul.f32 %v1430, %v1462
        %v1495 = vmul.f32 %v1431, %v1463
        %v1496 = vmul.f32 %v1432, %v1464
        %v1497 = vmul.f32 %v1433, %v1465
        %v1498 = vmul.f32 %v1434, %v1466
        %v1499 = vmul.f32 %v1435, %v1467
        %v1500 = vmul.f32 %v1436, %v1468
        %v1501 = vmul.f32 %v1437, %v1469
        %v1502 = vmul.f32 %v1438, %v1470
        %v1503 = vmul.f32 %v1439, %v1471
        %v1504 = vmul.f32 %v1440, %v1472
        %v1505 = vmul.f32 %v1441, %v1473
        %v1506 = vmul.f32 %v1442, %v1474
        %v1507 = vmul.f32 %v1443, %v1475
        %v1508 = vmul.f32 %v1444, %v1476
        %v1509 = vmul.f32 %v1445, %v1477
        %v1510 = vmul.f32 %v1446, %v1478
        %v1511 = vmul.f32 %v1479, 0.044715
        %v1512 = vmul.f32 %v1480, 0.044715
        %v1513 = vmul.f32 %v1481, 0.044715
        %v1514 = vmul.f32 %v1482, 0.044715
        %v1515 = vmul.f32 %v1483, 0.044715
        %v1516 = vmul.f32 %v1484, 0.044715
        %v1517 = vmul.f32 %v1485, 0.044715
        %v1518 = vmul.f32 %v1486, 0.044715
        %v1519 = vmul.f32 %v1487, 0.044715
        %v1520 = vmul.f32 %v1488, 0.044715
        %v1521 = vmul.f32 %v1489, 0.044715
        %v1522 = vmul.f32 %v1490, 0.044715
        %v1523 = vmul.f32 %v1491, 0.044715
        %v1524 = vmul.f32 %v1492, 0.044715
        %v1525 = vmul.f32 %v1493, 0.044715
        %v1526 = vmul.f32 %v1494, 0.044715
        %v1527 = vmul.f32 %v1495, 0.044715
        %v1528 = vmul.f32 %v1496, 0.044715
        %v1529 = vmul.f32 %v1497, 0.044715
        %v1530 = vmul.f32 %v1498, 0.044715
        %v1531 = vmul.f32 %v1499, 0.044715
        %v1532 = vmul.f32 %v1500, 0.044715
        %v1533 = vmul.f32 %v1501, 0.044715
        %v1534 = vmul.f32 %v1502, 0.044715
        %v1535 = vmul.f32 %v1503, 0.044715
        %v1536 = vmul.f32 %v1504, 0.044715
        %v1537 = vmul.f32 %v1505, 0.044715
        %v1538 = vmul.f32 %v1506, 0.044715
        %v1539 = vmul.f32 %v1507, 0.044715
        %v1540 = vmul.f32 %v1508, 0.044715
        %v1541 = vmul.f32 %v1509, 0.044715
        %v1542 = vmul.f32 %v1510, 0.044715
        %v1543 = vadd.f32 %v1415, %v1511
        %v1544 = vadd.f32 %v1416, %v1512
        %v1545 = vadd.f32 %v1417, %v1513
        %v1546 = vadd.f32 %v1418, %v1514
        %v1547 = vadd.f32 %v1419, %v1515
        %v1548 = vadd.f32 %v1420, %v1516
        %v1549 = vadd.f32 %v1421, %v1517
        %v1550 = vadd.f32 %v1422, %v1518
        %v1551 = vadd.f32 %v1423, %v1519
        %v1552 = vadd.f32 %v1424, %v1520
        %v1553 = vadd.f32 %v1425, %v1521
        %v1554 = vadd.f32 %v1426, %v1522
        %v1555 = vadd.f32 %v1427, %v1523
        %v1556 = vadd.f32 %v1428, %v1524
        %v1557 = vadd.f32 %v1429, %v1525
        %v1558 = vadd.f32 %v1430, %v1526
        %v1559 = vadd.f32 %v1431, %v1527
        %v1560 = vadd.f32 %v1432, %v1528
        %v1561 = vadd.f32 %v1433, %v1529
        %v1562 = vadd.f32 %v1434, %v1530
        %v1563 = vadd.f32 %v1435, %v1531
        %v1564 = vadd.f32 %v1436, %v1532
        %v1565 = vadd.f32 %v1437, %v1533
        %v1566 = vadd.f32 %v1438, %v1534
        %v1567 = vadd.f32 %v1439, %v1535
        %v1568 = vadd.f32 %v1440, %v1536
        %v1569 = vadd.f32 %v1441, %v1537
        %v1570 = vadd.f32 %v1442, %v1538
        %v1571 = vadd.f32 %v1443, %v1539
        %v1572 = vadd.f32 %v1444, %v1540
        %v1573 = vadd.f32 %v1445, %v1541
        %v1574 = vadd.f32 %v1446, %v1542
        %v1575 = vmul.f32 %v1543, 0.7978846
        %v1576 = vmul.f32 %v1544, 0.7978846
        %v1577 = vmul.f32 %v1545, 0.7978846
        %v1578 = vmul.f32 %v1546, 0.7978846
        %v1579 = vmul.f32 %v1547, 0.7978846
        %v1580 = vmul.f32 %v1548, 0.7978846
        %v1581 = vmul.f32 %v1549, 0.7978846
        %v1582 = vmul.f32 %v1550, 0.7978846
        %v1583 = vmul.f32 %v1551, 0.7978846
        %v1584 = vmul.f32 %v1552, 0.7978846
        %v1585 = vmul.f32 %v1553, 0.7978846
        %v1586 = vmul.f32 %v1554, 0.7978846
        %v1587 = vmul.f32 %v1555, 0.7978846
        %v1588 = vmul.f32 %v1556, 0.7978846
        %v1589 = vmul.f32 %v1557, 0.7978846
        %v1590 = vmul.f32 %v1558, 0.7978846
        %v1591 = vmul.f32 %v1559, 0.7978846
        %v1592 = vmul.f32 %v1560, 0.7978846
        %v1593 = vmul.f32 %v1561, 0.7978846
        %v1594 = vmul.f32 %v1562, 0.7978846
        %v1595 = vmul.f32 %v1563, 0.7978846
        %v1596 = vmul.f32 %v1564, 0.7978846
        %v1597 = vmul.f32 %v1565, 0.7978846
        %v1598 = vmul.f32 %v1566, 0.7978846
        %v1599 = vmul.f32 %v1567, 0.7978846
        %v1600 = vmul.f32 %v1568, 0.7978846
        %v1601 = vmul.f32 %v1569, 0.7978846
        %v1602 = vmul.f32 %v1570, 0.7978846
        %v1603 = vmul.f32 %v1571, 0.7978846
        %v1604 = vmul.f32 %v1572, 0.7978846
        %v1605 = vmul.f32 %v1573, 0.7978846
        %v1606 = vmul.f32 %v1574, 0.7978846
        %v1607 = vtanh.pop %v1575
        %v1608 = vtanh.pop %v1576
        %v1609 = vtanh.pop %v1577
        %v1610 = vtanh.pop %v1578
        %v1611 = vtanh.pop %v1579
        %v1612 = vtanh.pop %v1580
        %v1613 = vtanh.pop %v1581
        %v1614 = vtanh.pop %v1582
        %v1615 = vtanh.pop %v1583
        %v1616 = vtanh.pop %v1584
        %v1617 = vtanh.pop %v1585
        %v1618 = vtanh.pop %v1586
        %v1619 = vtanh.pop %v1587
        %v1620 = vtanh.pop %v1588
        %v1621 = vtanh.pop %v1589
        %v1622 = vtanh.pop %v1590
        %v1623 = vtanh.pop %v1591
        %v1624 = vtanh.pop %v1592
        %v1625 = vtanh.pop %v1593
        %v1626 = vtanh.pop %v1594
        %v1627 = vtanh.pop %v1595
        %v1628 = vtanh.pop %v1596
        %v1629 = vtanh.pop %v1597
        %v1630 = vtanh.pop %v1598
        %v1631 = vtanh.pop %v1599
        %v1632 = vtanh.pop %v1600
        %v1633 = vtanh.pop %v1601
        %v1634 = vtanh.pop %v1602
        %v1635 = vtanh.pop %v1603
        %v1636 = vtanh.pop %v1604
        %v1637 = vtanh.pop %v1605
        %v1638 = vtanh.pop %v1606
        %v1639 = vadd.f32 %v1607, 1.0
        %v1640 = vadd.f32 %v1608, 1.0
        %v1641 = vadd.f32 %v1609, 1.0
        %v1642 = vadd.f32 %v1610, 1.0
        %v1643 = vadd.f32 %v1611, 1.0
        %v1644 = vadd.f32 %v1612, 1.0
        %v1645 = vadd.f32 %v1613, 1.0
        %v1646 = vadd.f32 %v1614, 1.0
        %v1647 = vadd.f32 %v1615, 1.0
        %v1648 = vadd.f32 %v1616, 1.0
        %v1649 = vadd.f32 %v1617, 1.0
        %v1650 = vadd.f32 %v1618, 1.0
        %v1651 = vadd.f32 %v1619, 1.0
        %v1652 = vadd.f32 %v1620, 1.0
        %v1653 = vadd.f32 %v1621, 1.0
        %v1654 = vadd.f32 %v1622, 1.0
        %v1655 = vadd.f32 %v1623, 1.0
        %v1656 = vadd.f32 %v1624, 1.0
        %v1657 = vadd.f32 %v1625, 1.0
        %v1658 = vadd.f32 %v1626, 1.0
        %v1659 = vadd.f32 %v1627, 1.0
        %v1660 = vadd.f32 %v1628, 1.0
        %v1661 = vadd.f32 %v1629, 1.0
        %v1662 = vadd.f32 %v1630, 1.0
        %v1663 = vadd.f32 %v1631, 1.0
        %v1664 = vadd.f32 %v1632, 1.0
        %v1665 = vadd.f32 %v1633, 1.0
        %v1666 = vadd.f32 %v1634, 1.0
        %v1667 = vadd.f32 %v1635, 1.0
        %v1668 = vadd.f32 %v1636, 1.0
        %v1669 = vadd.f32 %v1637, 1.0
        %v1670 = vadd.f32 %v1638, 1.0
        %v1671 = vmul.f32 %v1639, 0.5
        %v1672 = vmul.f32 %v1640, 0.5
        %v1673 = vmul.f32 %v1641, 0.5
        %v1674 = vmul.f32 %v1642, 0.5
        %v1675 = vmul.f32 %v1643, 0.5
        %v1676 = vmul.f32 %v1644, 0.5
        %v1677 = vmul.f32 %v1645, 0.5
        %v1678 = vmul.f32 %v1646, 0.5
        %v1679 = vmul.f32 %v1647, 0.5
        %v1680 = vmul.f32 %v1648, 0.5
        %v1681 = vmul.f32 %v1649, 0.5
        %v1682 = vmul.f32 %v1650, 0.5
        %v1683 = vmul.f32 %v1651, 0.5
        %v1684 = vmul.f32 %v1652, 0.5
        %v1685 = vmul.f32 %v1653, 0.5
        %v1686 = vmul.f32 %v1654, 0.5
        %v1687 = vmul.f32 %v1655, 0.5
        %v1688 = vmul.f32 %v1656, 0.5
        %v1689 = vmul.f32 %v1657, 0.5
        %v1690 = vmul.f32 %v1658, 0.5
        %v1691 = vmul.f32 %v1659, 0.5
        %v1692 = vmul.f32 %v1660, 0.5
        %v1693 = vmul.f32 %v1661, 0.5
        %v1694 = vmul.f32 %v1662, 0.5
        %v1695 = vmul.f32 %v1663, 0.5
        %v1696 = vmul.f32 %v1664, 0.5
        %v1697 = vmul.f32 %v1665, 0.5
        %v1698 = vmul.f32 %v1666, 0.5
        %v1699 = vmul.f32 %v1667, 0.5
        %v1700 = vmul.f32 %v1668, 0.5
        %v1701 = vmul.f32 %v1669, 0.5
        %v1702 = vmul.f32 %v1670, 0.5
        %v1703 = vmul.f32 %v1415, %v1671
        %v1704 = vmul.f32 %v1416, %v1672
        %v1705 = vmul.f32 %v1417, %v1673
        %v1706 = vmul.f32 %v1418, %v1674
        %v1707 = vmul.f32 %v1419, %v1675
        %v1708 = vmul.f32 %v1420, %v1676
        %v1709 = vmul.f32 %v1421, %v1677
        %v1710 = vmul.f32 %v1422, %v1678
        %v1711 = vmul.f32 %v1423, %v1679
        %v1712 = vmul.f32 %v1424, %v1680
        %v1713 = vmul.f32 %v1425, %v1681
        %v1714 = vmul.f32 %v1426, %v1682
        %v1715 = vmul.f32 %v1427, %v1683
        %v1716 = vmul.f32 %v1428, %v1684
        %v1717 = vmul.f32 %v1429, %v1685
        %v1718 = vmul.f32 %v1430, %v1686
        %v1719 = vmul.f32 %v1431, %v1687
        %v1720 = vmul.f32 %v1432, %v1688
        %v1721 = vmul.f32 %v1433, %v1689
        %v1722 = vmul.f32 %v1434, %v1690
        %v1723 = vmul.f32 %v1435, %v1691
        %v1724 = vmul.f32 %v1436, %v1692
        %v1725 = vmul.f32 %v1437, %v1693
        %v1726 = vmul.f32 %v1438, %v1694
        %v1727 = vmul.f32 %v1439, %v1695
        %v1728 = vmul.f32 %v1440, %v1696
        %v1729 = vmul.f32 %v1441, %v1697
        %v1730 = vmul.f32 %v1442, %v1698
        %v1731 = vmul.f32 %v1443, %v1699
        %v1732 = vmul.f32 %v1444, %v1700
        %v1733 = vmul.f32 %v1445, %v1701
        %v1734 = vmul.f32 %v1446, %v1702
        %v1735 = vpack.c.bf16 %v1705, %v1703
        %v1736 = vpack.c.bf16 %v1706, %v1704
        %v1737 = vpack.c.bf16 %v1709, %v1707
        %v1738 = vpack.c.bf16 %v1710, %v1708
        %v1739 = vpack.c.bf16 %v1713, %v1711
        %v1740 = vpack.c.bf16 %v1714, %v1712
        %v1741 = vpack.c.bf16 %v1717, %v1715
        %v1742 = vpack.c.bf16 %v1718, %v1716
        %v1743 = vpack.c.bf16 %v1721, %v1719
        %v1744 = vpack.c.bf16 %v1722, %v1720
        %v1745 = vpack.c.bf16 %v1725, %v1723
        %v1746 = vpack.c.bf16 %v1726, %v1724
        %v1747 = vpack.c.bf16 %v1729, %v1727
        %v1748 = vpack.c.bf16 %v1730, %v1728
        %v1749 = vpack.c.bf16 %v1733, %v1731
        %v1750 = vpack.c.bf16 %v1734, %v1732
        %v1751 = vld [vmem:[%s5] sm:$0x3]
        %v1752 = vld [vmem:[%s7] sm:$0xf]
        %1754 = vset.pattern.permute.xlu0 0
        %1755 = vperm.xlu0 %1754, %v1752
        %v1756 = vpop.permute.xlu0 %1755
        %1758 = vmatpush.bf16.msra.mxu0 %v1749
        %1759 = vmatpush.bf16.msra.mxu0 %v1747
        %1760 = vmatpush.bf16.msra.mxu0 %v1745
        %1761 = vmatpush.bf16.msra.mxu0 %v1743
        %1762 = vmatpush.bf16.msra.mxu0 %v1741
        %1763 = vmatpush.bf16.msra.mxu0 %v1739
        %1764 = vmatpush.bf16.msra.mxu0 %v1737
        %1765 = vmatpush.bf16.msra.mxu0 %v1735
        %1766 = vmatmul.bf16.gmra.mxu0 %v1751
        %v1767 = vpop.f32.mrf.mxu0
        %v1768 = vadd.f32 %v1756, %v1767
        %v1769 = vpop.f32.mrf.mxu0
        %1770 = vdwg.mxu0
        %1771 = vmatpush.bf16.msra.mxu0 %v1750
        %1772 = vmatpush.bf16.msra.mxu0 %v1748
        %1773 = vmatpush.bf16.msra.mxu0 %v1746
        %1774 = vmatpush.bf16.msra.mxu0 %v1744
        %1775 = vmatpush.bf16.msra.mxu0 %v1742
        %1776 = vmatpush.bf16.msra.mxu0 %v1740
        %1777 = vmatpush.bf16.msra.mxu0 %v1738
        %1778 = vmatpush.bf16.msra.mxu0 %v1736
        %1779 = vmatmul.bf16.gmra.mxu0 %v1751
        %v1780 = vpop.f32.mrf.mxu0
        %v1781 = vadd.f32 %v1756, %v1780
        %v1782 = vpop.f32.mrf.mxu0
        %1783 = vdwg.mxu0
        %v1786 = vrot.slane %v1781, 4
        %vm1787 = vcmask 1043456
        %v1788 = vsel %vm1787, %v1768, %v1786
        %1790 = vst [vmem:[%s353] sm:$0xff] %v1788
        %s1791 = sand.u32 %s229, 1
        %s1792 = scalar_lea.sflag [#allocation3], %s1791
        %s1793 = sand.u32 %s229, 1
        %s1794 = smul.addr %s1793, 8
        %s1795 = scalar_lea.vmem [#allocation2], %s1794
        // Predicated region
        $region53: #{tpu_custom_call.1} parent=51 // pred_check
          %p1796 = pneg %p239
        $region54: #{tpu_custom_call.1} parent=51 // pred_check_branch
          %1798 = sbr.rel (%p1796) target = $region56
        $region55: #{tpu_custom_call.1} parent=51 // pred_region
          %s1799 = smul.u32 2, %s27
          %1801 = vsyncadd %s1792, 0
          %s1802 = smul.addr %s26, 2
          %s1803 = sadd.s32 %s1799, %s1802
          %s1804 = smul.addr %s1803, 4
          %s1805 = scalar_lea.hbm %s8, %s1804
          %s1807 = sshll.u32 %s1795, 4
          %s1808 = int_to_ptr.vmem [resolvable:$true] %s1807
          %s1809 = sshll.u32 %s1805, 4
          %s1810 = int_to_ptr.hbm [resolvable:$true] %s1809
          %1812 = dma.vmem_to_hbm [thread:$0]  %s1808, 128, %s1810, %s1792
        $region56: #{tpu_custom_call.1} parent=51 // pred_fallthru
          _
      $region52: #{tpu_custom_call.1} parent=5 // pred_fallthru
        _
      %p1813 = scmp.le.s32.totalorder 2, %s17
      // Predicated region
      $region57: #{tpu_custom_call.1} parent=5 // pred_check
        %p1814 = pneg %p1813
      $region58: #{tpu_custom_call.1} parent=5 // pred_check_branch
        %1816 = sbr.rel (%p1814) target = $region60
      $region59: #{tpu_custom_call.1} parent=5 // pred_region
        %s1817 = ssub.s32 %s17, 2
        // Predicated region
        $region61: #{tpu_custom_call.1} parent=59 // pred_check
          %p1818 = pneg %p245
        $region62: #{tpu_custom_call.1} parent=59 // pred_check_branch
          %1820 = sbr.rel (%p1818) target = $region64
        $region63: #{tpu_custom_call.1} parent=59 // pred_region
          %s1821 = sand.u32 %s230, 1
          %s1822 = scalar_lea.sflag [#allocation3], %s1821
          %s1823 = sand.u32 %s230, 1
          %s1824 = smul.addr %s1823, 8
          %s1825 = scalar_lea.vmem [#allocation2], %s1824
          %1827 = dma.done %s1822, 128
        $region64: #{tpu_custom_call.1} parent=59 // pred_fallthru
          _
      $region60: #{tpu_custom_call.1} parent=5 // pred_fallthru
        _
    $region6: #{tpu_custom_call.1} parent=1 // loop_footer
      %s21 = sadd.s32 1, %s17
    $region7: #{tpu_custom_call.1} parent=1 // loop_footer_branch
      %16 = sbr.rel target = $region3
    $region8: #{tpu_custom_call.1} parent=1 // loop_exit
      _
    %1828 = vsyncpa [#allocation3], 1
    %s1829 = scalar_lea.sflag [#allocation3], 1
    %1830 = vsyncpa %s1829, 1

</llo_original>
